<compile_context>
chip_gen: v7x
topology: tpu7x:2x2x1
jax: 0.10.0
libtpu: 0.0.40
codegen_flags: <defaults>
</compile_context>

<pallas_src>
import jax
import jax.numpy as jnp
from jax.experimental import pallas as pl
from jax.experimental.pallas import tpu as pltpu

IMG_SIZE = 28
HIDDEN = 256
OUT_DIM = IMG_SIZE * IMG_SIZE * 3          # 2352
TB_MAX = 512                               # batch tile cap


def _round_up8(n):
    return ((n + 7) // 8) * 8


def generator_kernel(z_ref, w1_ref, b1_ref, w2_ref, b2_ref, o_ref):
    # Layer 1: bf16 MXU matmul, f32 accumulation; bias + ReLU in f32 (VPU).
    h = jnp.dot(z_ref[...], w1_ref[...], preferred_element_type=jnp.float32)
    h = jnp.maximum(h + b1_ref[...], 0.0)
    # Layer 2: bf16 MXU matmul (cast activations), f32 accumulation.
    y = jnp.dot(h.astype(jnp.bfloat16), w2_ref[...],
                preferred_element_type=jnp.float32)
    # TODO(synk): on v6e/v7x the tanh could use the bf16 EUP path for a further
    # epilogue speedup; kept f32 so the same kernel is also optimal on v5e.
    o_ref[...] = jnp.tanh(y + b2_ref[...]).astype(o_ref.dtype)


def prepare_params(w1, b1, w2, b2):
    """One-time conversion of f32 params into kernel-ready form (call at init).

    Weights are stored transposed (in_features, out_features) so the kernel
    computes x @ W (equivalent to PyTorch's x @ W.T + b).
    """
    return (w1.astype(jnp.bfloat16),
            b1.reshape(1, HIDDEN).astype(jnp.float32),
            w2.astype(jnp.bfloat16),
            b2.reshape(1, OUT_DIM).astype(jnp.float32))


def generator_forward(z, w1_b, b1_f, w2_b, b2_f, *, tb_max=TB_MAX,
                      out_dtype=jnp.bfloat16):
    """z: (B, latent) f32 -> (B, 3, 28, 28) in out_dtype.

    Expects params already processed by prepare_params (bf16 weights,
    f32 (1, N) biases). out_dtype defaults to bf16 (writeback-bound kernel);
    pass jnp.float32 to match the PyTorch output dtype exactly.
    """
    B, latent = z.shape

    # Batch tile: multiple of 8 (sublane), capped; ensure >=2 grid steps when
    # the batch allows, so megacore / dual-TC parts can split the batch axis.
    tb = min(tb_max, _round_up8(B))
    if B >= 16 and pl.cdiv(B, tb) < 2:
        tb = _round_up8(pl.cdiv(B, 2))
    b_pad = pl.cdiv(B, tb) * tb
    grid = (b_pad // tb,)

    # Per-call input prep is limited to z (cast to bf16, pad batch if needed).
    z_p = z.astype(jnp.bfloat16)
    if b_pad != B:
        z_p = jnp.pad(z_p, ((0, b_pad - B), (0, 0)))

    out_bytes = jnp.dtype(out_dtype).itemsize
    cost = pl.CostEstimate(
        flops=2 * b_pad * (latent * HIDDEN + HIDDEN * OUT_DIM),
        transcendentals=b_pad * OUT_DIM,
        bytes_accessed=(z_p.size * 2 + w1_b.size * 2 + w2_b.size * 2
                        + b1_f.size * 4 + b2_f.size * 4
                        + b_pad * OUT_DIM * out_bytes),
    )

    flat = pl.pallas_call(
        generator_kernel,
        out_shape=jax.ShapeDtypeStruct((b_pad, OUT_DIM), out_dtype),
        grid=grid,
        in_specs=[
            pl.BlockSpec((tb, latent), lambda i: (i, 0)),        # z: tiled over batch
            pl.BlockSpec((latent, HIDDEN), lambda i: (0, 0)),    # w1: resident
            pl.BlockSpec((1, HIDDEN), lambda i: (0, 0)),         # b1: resident
            pl.BlockSpec((HIDDEN, OUT_DIM), lambda i: (0, 0)),   # w2: resident
            pl.BlockSpec((1, OUT_DIM), lambda i: (0, 0)),        # b2: resident
        ],
        out_specs=pl.BlockSpec((tb, OUT_DIM), lambda i: (i, 0)),
        compiler_params=pltpu.CompilerParams(
            dimension_semantics=("parallel",),
            vmem_limit_bytes=32 * 1024 * 1024,
        ),
        cost_estimate=cost,
    )(z_p, w1_b, b1_f, w2_b, b2_f)

    if b_pad != B:
        flat = flat[:B]
    # Row-major reshape == torch .view(-1, 3, 28, 28); free for contiguous rows.
    return flat.reshape(B, 3, IMG_SIZE, IMG_SIZE)


def init_params(key, latent_dim):
    """Init mimicking nn.Linear's U(-1/sqrt(fan_in), 1/sqrt(fan_in)); returns
    both the raw f32 params (for reference math) and kernel-ready params."""
    k1, k2, k3, k4 = jax.random.split(key, 4)
    bound1 = 1.0 / float(jnp.sqrt(latent_dim))
    bound2 = 1.0 / float(jnp.sqrt(HIDDEN))
    w1 = jax.random.uniform(k1, (latent_dim, HIDDEN), jnp.float32, -bound1, bound1)
    b1 = jax.random.uniform(k2, (HIDDEN,), jnp.float32, -bound1, bound1)
    w2 = jax.random.uniform(k3, (HIDDEN, OUT_DIM), jnp.float32, -bound2, bound2)
    b2 = jax.random.uniform(k4, (OUT_DIM,), jnp.float32, -bound2, bound2)
    return (w1, b1, w2, b2), prepare_params(w1, b1, w2, b2)


if __name__ == "__main__":
    latent_dim = 32
    batch = 8

    key = jax.random.PRNGKey(0)
    kz, kp = jax.random.split(key)
    z = jax.random.normal(kz, (batch, latent_dim), jnp.float32)
    (w1, b1, w2, b2), kernel_params = init_params(kp, latent_dim)

    out = jax.block_until_ready(generator_forward(z, *kernel_params))

    assert out.shape == (batch, 3, IMG_SIZE, IMG_SIZE), out.shape
    assert out.dtype == jnp.bfloat16, out.dtype
    out_f32 = out.astype(jnp.float32)

    # Reference 1: same bf16-matmul / f32-accumulate math as the kernel (only
    # difference is the final bf16 rounding of the stored tanh output).
    w1b, w2b = w1.astype(jnp.bfloat16), w2.astype(jnp.bfloat16)
    h_ref = jnp.maximum(
        jnp.dot(z.astype(jnp.bfloat16), w1b, preferred_element_type=jnp.float32)
        + b1.reshape(1, -1), 0.0)
    ref_bf16 = jnp.tanh(
        jnp.dot(h_ref.astype(jnp.bfloat16), w2b, preferred_element_type=jnp.float32)
        + b2.reshape(1, -1)).reshape(batch, 3, IMG_SIZE, IMG_SIZE)
    assert jnp.allclose(out_f32, ref_bf16, atol=1e-2, rtol=0.0)

    # Reference 2: pure f32 PyTorch-equivalent math (loose, bf16-matmul tolerance).
    # NOTE: bf16 matmul operands + bf16 output are an intentional precision
    # tradeoff vs. the f32 PyTorch module (fine for GAN image generation).
    ref_f32 = jnp.tanh(
        jnp.maximum(z @ w1 + b1.reshape(1, -1), 0.0) @ w2 + b2.reshape(1, -1)
    ).reshape(batch, 3, IMG_SIZE, IMG_SIZE)
    assert jnp.allclose(out_f32, ref_f32, atol=5e-2, rtol=0.0)

    print("KERNEL_OK")
</pallas_src>

<mosaic_0001>
module attributes {stable_mosaic.version = 11 : i64} {
  func.func @generator_kernel(%arg0: i32, %arg1: memref<8x32xbf16, #tpu.memory_space<vmem>>, %arg2: memref<32x256xbf16, #tpu.memory_space<vmem>>, %arg3: memref<1x256xf32, #tpu.memory_space<vmem>>, %arg4: memref<256x2352xbf16, #tpu.memory_space<vmem>>, %arg5: memref<1x2352xf32, #tpu.memory_space<vmem>>, %arg6: memref<8x2352xbf16, #tpu.memory_space<vmem>>) attributes {dimension_semantics = [#tpu.dimension_semantics<parallel>], iteration_bounds = array<i64: 1>, scalar_prefetch = 0 : i64, scratch_operands = 0 : i64, tpu.core_type = #tpu.core_type<tc>, window_params = [{transform_indices = @transform_0, window_bounds = array<i64: 8, 32>}, {pipeline_mode = #tpu.pipeline_mode<synchronous>, transform_indices = @transform_1, window_bounds = array<i64: 32, 256>}, {pipeline_mode = #tpu.pipeline_mode<synchronous>, transform_indices = @transform_2, window_bounds = array<i64: 1, 256>}, {pipeline_mode = #tpu.pipeline_mode<synchronous>, transform_indices = @transform_3, window_bounds = array<i64: 256, 2352>}, {pipeline_mode = #tpu.pipeline_mode<synchronous>, transform_indices = @transform_4, window_bounds = array<i64: 1, 2352>}, {transform_indices = @transform_5, window_bounds = array<i64: 8, 2352>}]} {
    %c0 = arith.constant 0 : index
    %c0_0 = arith.constant 0 : index
    %0 = vector.load %arg1[%c0, %c0_0] : memref<8x32xbf16, #tpu.memory_space<vmem>>, vector<8x32xbf16>
    %c0_1 = arith.constant 0 : index
    %c0_2 = arith.constant 0 : index
    %1 = vector.load %arg2[%c0_1, %c0_2] : memref<32x256xbf16, #tpu.memory_space<vmem>>, vector<32x256xbf16>
    %cst = arith.constant dense<0.000000e+00> : vector<8x256xf32>
    %2 = tpu.matmul %0, %1, %cst {dimension_numbers = #tpu.dot_dimension_numbers<[1], [0], [0], [1], [0, 0, 1, 1], [], []>} : vector<8x32xbf16>, vector<32x256xbf16>, vector<8x256xf32> -> vector<8x256xf32>
    %c0_3 = arith.constant 0 : index
    %c0_4 = arith.constant 0 : index
    %3 = vector.load %arg3[%c0_3, %c0_4] : memref<1x256xf32, #tpu.memory_space<vmem>>, vector<1x256xf32>
    %4 = vector.broadcast %3 : vector<1x256xf32> to vector<8x256xf32>
    %5 = arith.addf %2, %4 : vector<8x256xf32>
    %cst_5 = arith.constant 0.000000e+00 : f32
    %6 = vector.broadcast %cst_5 : f32 to vector<8x256xf32>
    %7 = arith.maximumf %5, %6 : vector<8x256xf32>
    %8 = arith.truncf %7 : vector<8x256xf32> to vector<8x256xbf16>
    %c0_6 = arith.constant 0 : index
    %c0_7 = arith.constant 0 : index
    %9 = vector.load %arg4[%c0_6, %c0_7] : memref<256x2352xbf16, #tpu.memory_space<vmem>>, vector<256x2352xbf16>
    %cst_8 = arith.constant dense<0.000000e+00> : vector<8x2352xf32>
    %10 = tpu.matmul %8, %9, %cst_8 {dimension_numbers = #tpu.dot_dimension_numbers<[1], [0], [0], [1], [0, 0, 1, 1], [], []>} : vector<8x256xbf16>, vector<256x2352xbf16>, vector<8x2352xf32> -> vector<8x2352xf32>
    %c0_9 = arith.constant 0 : index
    %c0_10 = arith.constant 0 : index
    %11 = vector.load %arg5[%c0_9, %c0_10] : memref<1x2352xf32, #tpu.memory_space<vmem>>, vector<1x2352xf32>
    %12 = vector.broadcast %11 : vector<1x2352xf32> to vector<8x2352xf32>
    %13 = arith.addf %10, %12 : vector<8x2352xf32>
    %14 = math.tanh %13 : vector<8x2352xf32>
    %15 = arith.truncf %14 : vector<8x2352xf32> to vector<8x2352xbf16>
    %c0_11 = arith.constant 0 : index
    %c0_12 = arith.constant 0 : index
    %16 = vector.load %arg6[%c0_11, %c0_12] : memref<8x2352xbf16, #tpu.memory_space<vmem>>, vector<8x2352xbf16>
    tpu.vector_store %arg6[%c0_11, %c0_12], %15 {strides = array<i32>} : memref<8x2352xbf16, #tpu.memory_space<vmem>>, vector<8x2352xbf16>,
    return
  }
  func.func @transform_0(%arg0: i32) -> (i32, i32) {
    %c0_i32 = arith.constant 0 : i32
    %c0_i32_0 = arith.constant 0 : i32
    return %arg0, %c0_i32 : i32, i32
  }
  func.func @transform_1(%arg0: i32) -> (i32, i32) {
    %c0_i32 = arith.constant 0 : i32
    %c0_i32_0 = arith.constant 0 : i32
    %c0_i32_1 = arith.constant 0 : i32
    return %c0_i32, %c0_i32_0 : i32, i32
  }
  func.func @transform_2(%arg0: i32) -> (i32, i32) {
    %c0_i32 = arith.constant 0 : i32
    %c0_i32_0 = arith.constant 0 : i32
    %c0_i32_1 = arith.constant 0 : i32
    return %c0_i32, %c0_i32_0 : i32, i32
  }
  func.func @transform_3(%arg0: i32) -> (i32, i32) {
    %c0_i32 = arith.constant 0 : i32
    %c0_i32_0 = arith.constant 0 : i32
    %c0_i32_1 = arith.constant 0 : i32
    return %c0_i32, %c0_i32_0 : i32, i32
  }
  func.func @transform_4(%arg0: i32) -> (i32, i32) {
    %c0_i32 = arith.constant 0 : i32
    %c0_i32_0 = arith.constant 0 : i32
    %c0_i32_1 = arith.constant 0 : i32
    return %c0_i32, %c0_i32_0 : i32, i32
  }
  func.func @transform_5(%arg0: i32) -> (i32, i32) {
    %c0_i32 = arith.constant 0 : i32
    %c0_i32_0 = arith.constant 0 : i32
    return %arg0, %c0_i32 : i32, i32
  }
}

</mosaic_0001>

<llo_original>
// kernel: tpu_custom_call.1
$region0: #{tpu_custom_call.1}
  #allocation0 [shape = 'u32[]', space=smem, size = 0x4, offset = 0x4, fixed_abs, tag = 'smem constant byte address 0x4 - core index']
  #allocation1 [shape = 'u32[144,128]{1,0:T(1,128)}', space=vmem, size = 0x12000, scoped, tag = 'internal scratch']
  %s0 = inlined_call_operand.vmem [shape: bf16[8,32], index: 0, kind: input, shape index: {}]
  %s1 = inlined_call_operand.vmem [shape: bf16[32,256], index: 1, kind: input, shape index: {}]
  %s2 = inlined_call_operand.vmem [shape: f32[1,256], index: 2, kind: input, shape index: {}]
  %s3 = inlined_call_operand.vmem [shape: bf16[256,2352], index: 3, kind: input, shape index: {}]
  %s4 = inlined_call_operand.vmem [shape: f32[1,2352], index: 4, kind: input, shape index: {}]
  %s5 = inlined_call_operand.hbm [shape: bf16[8,2352], index: 5, kind: output, shape index: {}]
  %s6 = sld [smem:[#allocation0]]
  $region30: #{tpu_custom_call.1} parent=0
    _
  %s8 = ssub.s32 1, %s6
  %s9 = scalar_select 0, %s8, %s6
  $region1: #{tpu_custom_call.1} parent=0
    #allocation2 [shape = 'u8[38912]{0}', space=vmem, size = 0x9800, scoped, tag = 'output window, operand 0, single buffered']
    #allocation3 [shape = 's32[1]{0}', space=sflag, size = 0x4, scoped, tag = 'scoped memory for tpu_custom_call.1']
    %10 = vsyncpa [#allocation3], 0
    // Predicated region
    $region2: #{tpu_custom_call.1} parent=1 // pred_check
      _
    $region3: #{tpu_custom_call.1} parent=1 // pred_check_branch
      %12 = sbr.rel (0) target = $region5
    $region4: #{tpu_custom_call.1} parent=1 // pred_region
      _
    $region5: #{tpu_custom_call.1} parent=1 // pred_fallthru
      _
    // Predicated region
    $region6: #{tpu_custom_call.1} parent=1 // pred_check
      _
    $region7: #{tpu_custom_call.1} parent=1 // pred_check_branch
      %14 = sbr.rel (0) target = $region9
    $region8: #{tpu_custom_call.1} parent=1 // pred_region
      _
    $region9: #{tpu_custom_call.1} parent=1 // pred_fallthru
      _
    // Predicated region
    $region10: #{tpu_custom_call.1} parent=1 // pred_check
      _
    $region11: #{tpu_custom_call.1} parent=1 // pred_check_branch
      %16 = sbr.rel (0) target = $region13
    $region12: #{tpu_custom_call.1} parent=1 // pred_region
      _
    $region13: #{tpu_custom_call.1} parent=1 // pred_fallthru
      _
    // Predicated region
    $region14: #{tpu_custom_call.1} parent=1 // pred_check
      _
    $region15: #{tpu_custom_call.1} parent=1 // pred_check_branch
      %18 = sbr.rel (0) target = $region17
    $region16: #{tpu_custom_call.1} parent=1 // pred_region
      _
    $region17: #{tpu_custom_call.1} parent=1 // pred_fallthru
      _
    // Predicated region
    $region18: #{tpu_custom_call.1} parent=1 // pred_check
      _
    $region19: #{tpu_custom_call.1} parent=1 // pred_check_branch
      %20 = sbr.rel (0) target = $region21
    $region20: #{tpu_custom_call.1} parent=1 // pred_region
      _
    $region21: #{tpu_custom_call.1} parent=1 // pred_fallthru
      _
    %v22 = vld [vmem:[%s0] sm:$0xf]
    %v23 = vld [vmem:[%s1] sm:$0xff]
    %v24 = vld [vmem:[%s1 + $0x8] sm:$0xff]
    %v25 = vld [vmem:[%s1 + $0x10] sm:$0xff]
    %v26 = vld [vmem:[%s1 + $0x18] sm:$0xff]
    %v27 = vld [vmem:[%s2] sm:$0x3]
    %v29 = vlaneseq
    %v30 = vshrl.u32 %v29, 7
    %v31 = vsub.s32 0, %v30
    %v32 = vrot.slane %v27, %v31
    %v33 = vlaneseq
    %v34 = vshrl.u32 %v33, 7
    %v35 = vsub.s32 1, %v34
    %v36 = vrot.slane %v27, %v35
    %v43 = vunpack.c.l.b16 %v23
    %v44 = vunpack.c.h.b16 %v23
    %v45 = vunpack.c.l.b16 %v24
    %v46 = vunpack.c.h.b16 %v24
    %v47 = vunpack.c.l.b16 %v25
    %v48 = vunpack.c.h.b16 %v25
    %v49 = vunpack.c.l.b16 %v26
    %v50 = vunpack.c.h.b16 %v26
    %v51 = vpack.c.b16 %v45, %v43
    %v52 = vpack.c.b16 %v46, %v44
    %v53 = vpack.c.b16 %v49, %v47
    %v54 = vpack.c.b16 %v50, %v48
    %vm59 = vcmask 261120
    %v61 = vsel %vm59, %v22, 0
    %63 = vmatprep.subr.bf16.mxu0 %v52
    %64 = vmatpush1.bf16.msra.mxu0 %v51
    %65 = vmatprep.subr.bf16.mxu0 %v54
    %66 = vmatpush1.bf16.msra.mxu0 %v53
    %67 = vmatprep.subr.bf16.mxu0 0
    %68 = vmatpush1.bf16.msra.mxu0 0
    %69 = vmatprep.subr.bf16.mxu0 0
    %70 = vmatpush1.bf16.msra.mxu0 0
    %71 = vmatprep.subr.bf16.mxu0 0
    %72 = vmatpush1.bf16.msra.mxu0 0
    %73 = vmatprep.subr.bf16.mxu0 0
    %74 = vmatpush1.bf16.msra.mxu0 0
    %75 = vmatprep.subr.bf16.mxu0 0
    %76 = vmatpush1.bf16.msra.mxu0 0
    %77 = vmatprep.subr.bf16.mxu0 0
    %78 = vmatpush1.bf16.msra.mxu0 0
    %79 = vmatprep.subr.bf16.mxu0 0
    %80 = vmatpush1.bf16.msra.mxu0 0
    %81 = vmatprep.subr.bf16.mxu0 0
    %82 = vmatpush1.bf16.msra.mxu0 0
    %83 = vmatprep.subr.bf16.mxu0 0
    %84 = vmatpush1.bf16.msra.mxu0 0
    %85 = vmatprep.subr.bf16.mxu0 0
    %86 = vmatpush1.bf16.msra.mxu0 0
    %87 = vmatprep.subr.bf16.mxu0 0
    %88 = vmatpush1.bf16.msra.mxu0 0
    %89 = vmatprep.subr.bf16.mxu0 0
    %90 = vmatpush1.bf16.msra.mxu0 0
    %91 = vmatprep.subr.bf16.mxu0 0
    %92 = vmatpush1.bf16.msra.mxu0 0
    %93 = vmatprep.subr.bf16.mxu0 0
    %94 = vmatpush1.bf16.msra.mxu0 0
    %95 = vmatprep.mubr.bf16.mxu0 0
    %96 = vmatmul.mubr.bf16.gmra.mrb[0].mxu0 %v61
    %v97 = vpop.f32.mrb[0].mxu0
    %v98 = vadd.f32 %v32, %v97
    %v99 = vpop.f32.mrb[0].mxu0
    %v100 = vadd.f32 %v36, %v99
    %v101 = vpop.f32.mrb[0].mxu0
    %v102 = vpop.f32.mrb[0].mxu0
    %103 = vdwg.mxu0
    %v104 = vmax.f32 %v98, 0.0
    %v105 = vmax.f32 %v100, 0.0
    %v106 = vpack.c.bf16 %v104, %v104
    %v107 = vpack.c.bf16 %v105, %v105
    %v108 = vld [vmem:[%s3] sm:$0xff]
    %v109 = vld [vmem:[%s3 + $0x8] sm:$0xff]
    %v110 = vld [vmem:[%s3 + $0x10] sm:$0xff]
    %v111 = vld [vmem:[%s3 + $0x18] sm:$0xff]
    %v112 = vld [vmem:[%s3 + $0x20] sm:$0xff]
    %v113 = vld [vmem:[%s3 + $0x28] sm:$0xff]
    %v114 = vld [vmem:[%s3 + $0x30] sm:$0xff]
    %v115 = vld [vmem:[%s3 + $0x38] sm:$0xff]
    %v116 = vld [vmem:[%s3 + $0x40] sm:$0xff]
    %v117 = vld [vmem:[%s3 + $0x48] sm:$0xf]
    %v118 = vld [vmem:[%s3 + $0x4c] sm:$0xff]
    %v119 = vld [vmem:[%s3 + $0x54] sm:$0xff]
    %v120 = vld [vmem:[%s3 + $0x5c] sm:$0xff]
    %v121 = vld [vmem:[%s3 + $0x64] sm:$0xff]
    %v122 = vld [vmem:[%s3 + $0x6c] sm:$0xff]
    %v123 = vld [vmem:[%s3 + $0x74] sm:$0xff]
    %v124 = vld [vmem:[%s3 + $0x7c] sm:$0xff]
    %v125 = vld [vmem:[%s3 + $0x84] sm:$0xff]
    %v126 = vld [vmem:[%s3 + $0x8c] sm:$0xff]
    %v127 = vld [vmem:[%s3 + $0x94] sm:$0xf]
    %v128 = vld [vmem:[%s3 + $0x98] sm:$0xff]
    %v129 = vld [vmem:[%s3 + $0xa0] sm:$0xff]
    %v130 = vld [vmem:[%s3 + $0xa8] sm:$0xff]
    %v131 = vld [vmem:[%s3 + $0xb0] sm:$0xff]
    %v132 = vld [vmem:[%s3 + $0xb8] sm:$0xff]
    %v133 = vld [vmem:[%s3 + $0xc0] sm:$0xff]
    %v134 = vld [vmem:[%s3 + $0xc8] sm:$0xff]
    %v135 = vld [vmem:[%s3 + $0xd0] sm:$0xff]
    %v136 = vld [vmem:[%s3 + $0xd8] sm:$0xff]
    %v137 = vld [vmem:[%s3 + $0xe0] sm:$0xf]
    %v138 = vld [vmem:[%s3 + $0xe4] sm:$0xff]
    %v139 = vld [vmem:[%s3 + $0xec] sm:$0xff]
    %v140 = vld [vmem:[%s3 + $0xf4] sm:$0xff]
    %v141 = vld [vmem:[%s3 + $0xfc] sm:$0xff]
    %v142 = vld [vmem:[%s3 + $0x104] sm:$0xff]
    %v143 = vld [vmem:[%s3 + $0x10c] sm:$0xff]
    %v144 = vld [vmem:[%s3 + $0x114] sm:$0xff]
    %v145 = vld [vmem:[%s3 + $0x11c] sm:$0xff]
    %v146 = vld [vmem:[%s3 + $0x124] sm:$0xff]
    %v147 = vld [vmem:[%s3 + $0x12c] sm:$0xf]
    %v148 = vld [vmem:[%s3 + $0x130] sm:$0xff]
    %v149 = vld [vmem:[%s3 + $0x138] sm:$0xff]
    %v150 = vld [vmem:[%s3 + $0x140] sm:$0xff]
    %v151 = vld [vmem:[%s3 + $0x148] sm:$0xff]
    %v152 = vld [vmem:[%s3 + $0x150] sm:$0xff]
    %v153 = vld [vmem:[%s3 + $0x158] sm:$0xff]
    %v154 = vld [vmem:[%s3 + $0x160] sm:$0xff]
    %v155 = vld [vmem:[%s3 + $0x168] sm:$0xff]
    %v156 = vld [vmem:[%s3 + $0x170] sm:$0xff]
    %v157 = vld [vmem:[%s3 + $0x178] sm:$0xf]
    %v158 = vld [vmem:[%s3 + $0x17c] sm:$0xff]
    %v159 = vld [vmem:[%s3 + $0x184] sm:$0xff]
    %v160 = vld [vmem:[%s3 + $0x18c] sm:$0xff]
    %v161 = vld [vmem:[%s3 + $0x194] sm:$0xff]
    %v162 = vld [vmem:[%s3 + $0x19c] sm:$0xff]
    %v163 = vld [vmem:[%s3 + $0x1a4] sm:$0xff]
    %v164 = vld [vmem:[%s3 + $0x1ac] sm:$0xff]
    %v165 = vld [vmem:[%s3 + $0x1b4] sm:$0xff]
    %v166 = vld [vmem:[%s3 + $0x1bc] sm:$0xff]
    %v167 = vld [vmem:[%s3 + $0x1c4] sm:$0xf]
    %v168 = vld [vmem:[%s3 + $0x1c8] sm:$0xff]
    %v169 = vld [vmem:[%s3 + $0x1d0] sm:$0xff]
    %v170 = vld [vmem:[%s3 + $0x1d8] sm:$0xff]
    %v171 = vld [vmem:[%s3 + $0x1e0] sm:$0xff]
    %v172 = vld [vmem:[%s3 + $0x1e8] sm:$0xff]
    %v173 = vld [vmem:[%s3 + $0x1f0] sm:$0xff]
    %v174 = vld [vmem:[%s3 + $0x1f8] sm:$0xff]
    %v175 = vld [vmem:[%s3 + $0x200] sm:$0xff]
    %v176 = vld [vmem:[%s3 + $0x208] sm:$0xff]
    %v177 = vld [vmem:[%s3 + $0x210] sm:$0xf]
    %v178 = vld [vmem:[%s3 + $0x214] sm:$0xff]
    %v179 = vld [vmem:[%s3 + $0x21c] sm:$0xff]
    %v180 = vld [vmem:[%s3 + $0x224] sm:$0xff]
    %v181 = vld [vmem:[%s3 + $0x22c] sm:$0xff]
    %v182 = vld [vmem:[%s3 + $0x234] sm:$0xff]
    %v183 = vld [vmem:[%s3 + $0x23c] sm:$0xff]
    %v184 = vld [vmem:[%s3 + $0x244] sm:$0xff]
    %v185 = vld [vmem:[%s3 + $0x24c] sm:$0xff]
    %v186 = vld [vmem:[%s3 + $0x254] sm:$0xff]
    %v187 = vld [vmem:[%s3 + $0x25c] sm:$0xf]
    %v188 = vld [vmem:[%s3 + $0x260] sm:$0xff]
    %v189 = vld [vmem:[%s3 + $0x268] sm:$0xff]
    %v190 = vld [vmem:[%s3 + $0x270] sm:$0xff]
    %v191 = vld [vmem:[%s3 + $0x278] sm:$0xff]
    %v192 = vld [vmem:[%s3 + $0x280] sm:$0xff]
    %v193 = vld [vmem:[%s3 + $0x288] sm:$0xff]
    %v194 = vld [vmem:[%s3 + $0x290] sm:$0xff]
    %v195 = vld [vmem:[%s3 + $0x298] sm:$0xff]
    %v196 = vld [vmem:[%s3 + $0x2a0] sm:$0xff]
    %v197 = vld [vmem:[%s3 + $0x2a8] sm:$0xf]
    %v198 = vld [vmem:[%s3 + $0x2ac] sm:$0xff]
    %v199 = vld [vmem:[%s3 + $0x2b4] sm:$0xff]
    %v200 = vld [vmem:[%s3 + $0x2bc] sm:$0xff]
    %v201 = vld [vmem:[%s3 + $0x2c4] sm:$0xff]
    %v202 = vld [vmem:[%s3 + $0x2cc] sm:$0xff]
    %v203 = vld [vmem:[%s3 + $0x2d4] sm:$0xff]
    %v204 = vld [vmem:[%s3 + $0x2dc] sm:$0xff]
    %v205 = vld [vmem:[%s3 + $0x2e4] sm:$0xff]
    %v206 = vld [vmem:[%s3 + $0x2ec] sm:$0xff]
    %v207 = vld [vmem:[%s3 + $0x2f4] sm:$0xf]
    %v208 = vld [vmem:[%s3 + $0x2f8] sm:$0xff]
    %v209 = vld [vmem:[%s3 + $0x300] sm:$0xff]
    %v210 = vld [vmem:[%s3 + $0x308] sm:$0xff]
    %v211 = vld [vmem:[%s3 + $0x310] sm:$0xff]
    %v212 = vld [vmem:[%s3 + $0x318] sm:$0xff]
    %v213 = vld [vmem:[%s3 + $0x320] sm:$0xff]
    %v214 = vld [vmem:[%s3 + $0x328] sm:$0xff]
    %v215 = vld [vmem:[%s3 + $0x330] sm:$0xff]
    %v216 = vld [vmem:[%s3 + $0x338] sm:$0xff]
    %v217 = vld [vmem:[%s3 + $0x340] sm:$0xf]
    %v218 = vld [vmem:[%s3 + $0x344] sm:$0xff]
    %v219 = vld [vmem:[%s3 + $0x34c] sm:$0xff]
    %v220 = vld [vmem:[%s3 + $0x354] sm:$0xff]
    %v221 = vld [vmem:[%s3 + $0x35c] sm:$0xff]
    %v222 = vld [vmem:[%s3 + $0x364] sm:$0xff]
    %v223 = vld [vmem:[%s3 + $0x36c] sm:$0xff]
    %v224 = vld [vmem:[%s3 + $0x374] sm:$0xff]
    %v225 = vld [vmem:[%s3 + $0x37c] sm:$0xff]
    %v226 = vld [vmem:[%s3 + $0x384] sm:$0xff]
    %v227 = vld [vmem:[%s3 + $0x38c] sm:$0xf]
    %v228 = vld [vmem:[%s3 + $0x390] sm:$0xff]
    %v229 = vld [vmem:[%s3 + $0x398] sm:$0xff]
    %v230 = vld [vmem:[%s3 + $0x3a0] sm:$0xff]
    %v231 = vld [vmem:[%s3 + $0x3a8] sm:$0xff]
    %v232 = vld [vmem:[%s3 + $0x3b0] sm:$0xff]
    %v233 = vld [vmem:[%s3 + $0x3b8] sm:$0xff]
    %v234 = vld [vmem:[%s3 + $0x3c0] sm:$0xff]
    %v235 = vld [vmem:[%s3 + $0x3c8] sm:$0xff]
    %v236 = vld [vmem:[%s3 + $0x3d0] sm:$0xff]
    %v237 = vld [vmem:[%s3 + $0x3d8] sm:$0xf]
    %v238 = vld [vmem:[%s3 + $0x3dc] sm:$0xff]
    %v239 = vld [vmem:[%s3 + $0x3e4] sm:$0xff]
    %v240 = vld [vmem:[%s3 + $0x3ec] sm:$0xff]
    %v241 = vld [vmem:[%s3 + $0x3f4] sm:$0xff]
    %v242 = vld [vmem:[%s3 + $0x3fc] sm:$0xff]
    %v243 = vld [vmem:[%s3 + $0x404] sm:$0xff]
    %v244 = vld [vmem:[%s3 + $0x40c] sm:$0xff]
    %v245 = vld [vmem:[%s3 + $0x414] sm:$0xff]
    %v246 = vld [vmem:[%s3 + $0x41c] sm:$0xff]
    %v247 = vld [vmem:[%s3 + $0x424] sm:$0xf]
    %v248 = vld [vmem:[%s3 + $0x428] sm:$0xff]
    %v249 = vld [vmem:[%s3 + $0x430] sm:$0xff]
    %v250 = vld [vmem:[%s3 + $0x438] sm:$0xff]
    %v251 = vld [vmem:[%s3 + $0x440] sm:$0xff]
    %v252 = vld [vmem:[%s3 + $0x448] sm:$0xff]
    %v253 = vld [vmem:[%s3 + $0x450] sm:$0xff]
    %v254 = vld [vmem:[%s3 + $0x458] sm:$0xff]
    %v255 = vld [vmem:[%s3 + $0x460] sm:$0xff]
    %v256 = vld [vmem:[%s3 + $0x468] sm:$0xff]
    %v257 = vld [vmem:[%s3 + $0x470] sm:$0xf]
    %v258 = vld [vmem:[%s3 + $0x474] sm:$0xff]
    %v259 = vld [vmem:[%s3 + $0x47c] sm:$0xff]
    %v260 = vld [vmem:[%s3 + $0x484] sm:$0xff]
    %v261 = vld [vmem:[%s3 + $0x48c] sm:$0xff]
    %v262 = vld [vmem:[%s3 + $0x494] sm:$0xff]
    %v263 = vld [vmem:[%s3 + $0x49c] sm:$0xff]
    %v264 = vld [vmem:[%s3 + $0x4a4] sm:$0xff]
    %v265 = vld [vmem:[%s3 + $0x4ac] sm:$0xff]
    %v266 = vld [vmem:[%s3 + $0x4b4] sm:$0xff]
    %v267 = vld [vmem:[%s3 + $0x4bc] sm:$0xf]
    %v268 = vld [vmem:[%s3 + $0x4c0] sm:$0xff]
    %v269 = vld [vmem:[%s3 + $0x4c8] sm:$0xff]
    %v270 = vld [vmem:[%s3 + $0x4d0] sm:$0xff]
    %v271 = vld [vmem:[%s3 + $0x4d8] sm:$0xff]
    %v272 = vld [vmem:[%s3 + $0x4e0] sm:$0xff]
    %v273 = vld [vmem:[%s3 + $0x4e8] sm:$0xff]
    %v274 = vld [vmem:[%s3 + $0x4f0] sm:$0xff]
    %v275 = vld [vmem:[%s3 + $0x4f8] sm:$0xff]
    %v276 = vld [vmem:[%s3 + $0x500] sm:$0xff]
    %v277 = vld [vmem:[%s3 + $0x508] sm:$0xf]
    %v278 = vld [vmem:[%s3 + $0x50c] sm:$0xff]
    %v279 = vld [vmem:[%s3 + $0x514] sm:$0xff]
    %v280 = vld [vmem:[%s3 + $0x51c] sm:$0xff]
    %v281 = vld [vmem:[%s3 + $0x524] sm:$0xff]
    %v282 = vld [vmem:[%s3 + $0x52c] sm:$0xff]
    %v283 = vld [vmem:[%s3 + $0x534] sm:$0xff]
    %v284 = vld [vmem:[%s3 + $0x53c] sm:$0xff]
    %v285 = vld [vmem:[%s3 + $0x544] sm:$0xff]
    %v286 = vld [vmem:[%s3 + $0x54c] sm:$0xff]
    %v287 = vld [vmem:[%s3 + $0x554] sm:$0xf]
    %v288 = vld [vmem:[%s3 + $0x558] sm:$0xff]
    %v289 = vld [vmem:[%s3 + $0x560] sm:$0xff]
    %v290 = vld [vmem:[%s3 + $0x568] sm:$0xff]
    %v291 = vld [vmem:[%s3 + $0x570] sm:$0xff]
    %v292 = vld [vmem:[%s3 + $0x578] sm:$0xff]
    %v293 = vld [vmem:[%s3 + $0x580] sm:$0xff]
    %v294 = vld [vmem:[%s3 + $0x588] sm:$0xff]
    %v295 = vld [vmem:[%s3 + $0x590] sm:$0xff]
    %v296 = vld [vmem:[%s3 + $0x598] sm:$0xff]
    %v297 = vld [vmem:[%s3 + $0x5a0] sm:$0xf]
    %v298 = vld [vmem:[%s3 + $0x5a4] sm:$0xff]
    %v299 = vld [vmem:[%s3 + $0x5ac] sm:$0xff]
    %v300 = vld [vmem:[%s3 + $0x5b4] sm:$0xff]
    %v301 = vld [vmem:[%s3 + $0x5bc] sm:$0xff]
    %v302 = vld [vmem:[%s3 + $0x5c4] sm:$0xff]
    %v303 = vld [vmem:[%s3 + $0x5cc] sm:$0xff]
    %v304 = vld [vmem:[%s3 + $0x5d4] sm:$0xff]
    %v305 = vld [vmem:[%s3 + $0x5dc] sm:$0xff]
    %v306 = vld [vmem:[%s3 + $0x5e4] sm:$0xff]
    %v307 = vld [vmem:[%s3 + $0x5ec] sm:$0xf]
    %v308 = vld [vmem:[%s3 + $0x5f0] sm:$0xff]
    %v309 = vld [vmem:[%s3 + $0x5f8] sm:$0xff]
    %v310 = vld [vmem:[%s3 + $0x600] sm:$0xff]
    %v311 = vld [vmem:[%s3 + $0x608] sm:$0xff]
    %v312 = vld [vmem:[%s3 + $0x610] sm:$0xff]
    %v313 = vld [vmem:[%s3 + $0x618] sm:$0xff]
    %v314 = vld [vmem:[%s3 + $0x620] sm:$0xff]
    %v315 = vld [vmem:[%s3 + $0x628] sm:$0xff]
    %v316 = vld [vmem:[%s3 + $0x630] sm:$0xff]
    %v317 = vld [vmem:[%s3 + $0x638] sm:$0xf]
    %v318 = vld [vmem:[%s3 + $0x63c] sm:$0xff]
    %v319 = vld [vmem:[%s3 + $0x644] sm:$0xff]
    %v320 = vld [vmem:[%s3 + $0x64c] sm:$0xff]
    %v321 = vld [vmem:[%s3 + $0x654] sm:$0xff]
    %v322 = vld [vmem:[%s3 + $0x65c] sm:$0xff]
    %v323 = vld [vmem:[%s3 + $0x664] sm:$0xff]
    %v324 = vld [vmem:[%s3 + $0x66c] sm:$0xff]
    %v325 = vld [vmem:[%s3 + $0x674] sm:$0xff]
    %v326 = vld [vmem:[%s3 + $0x67c] sm:$0xff]
    %v327 = vld [vmem:[%s3 + $0x684] sm:$0xf]
    %v328 = vld [vmem:[%s3 + $0x688] sm:$0xff]
    %v329 = vld [vmem:[%s3 + $0x690] sm:$0xff]
    %v330 = vld [vmem:[%s3 + $0x698] sm:$0xff]
    %v331 = vld [vmem:[%s3 + $0x6a0] sm:$0xff]
    %v332 = vld [vmem:[%s3 + $0x6a8] sm:$0xff]
    %v333 = vld [vmem:[%s3 + $0x6b0] sm:$0xff]
    %v334 = vld [vmem:[%s3 + $0x6b8] sm:$0xff]
    %v335 = vld [vmem:[%s3 + $0x6c0] sm:$0xff]
    %v336 = vld [vmem:[%s3 + $0x6c8] sm:$0xff]
    %v337 = vld [vmem:[%s3 + $0x6d0] sm:$0xf]
    %v338 = vld [vmem:[%s3 + $0x6d4] sm:$0xff]
    %v339 = vld [vmem:[%s3 + $0x6dc] sm:$0xff]
    %v340 = vld [vmem:[%s3 + $0x6e4] sm:$0xff]
    %v341 = vld [vmem:[%s3 + $0x6ec] sm:$0xff]
    %v342 = vld [vmem:[%s3 + $0x6f4] sm:$0xff]
    %v343 = vld [vmem:[%s3 + $0x6fc] sm:$0xff]
    %v344 = vld [vmem:[%s3 + $0x704] sm:$0xff]
    %v345 = vld [vmem:[%s3 + $0x70c] sm:$0xff]
    %v346 = vld [vmem:[%s3 + $0x714] sm:$0xff]
    %v347 = vld [vmem:[%s3 + $0x71c] sm:$0xf]
    %v348 = vld [vmem:[%s3 + $0x720] sm:$0xff]
    %v349 = vld [vmem:[%s3 + $0x728] sm:$0xff]
    %v350 = vld [vmem:[%s3 + $0x730] sm:$0xff]
    %v351 = vld [vmem:[%s3 + $0x738] sm:$0xff]
    %v352 = vld [vmem:[%s3 + $0x740] sm:$0xff]
    %v353 = vld [vmem:[%s3 + $0x748] sm:$0xff]
    %v354 = vld [vmem:[%s3 + $0x750] sm:$0xff]
    %v355 = vld [vmem:[%s3 + $0x758] sm:$0xff]
    %v356 = vld [vmem:[%s3 + $0x760] sm:$0xff]
    %v357 = vld [vmem:[%s3 + $0x768] sm:$0xf]
    %v358 = vld [vmem:[%s3 + $0x76c] sm:$0xff]
    %v359 = vld [vmem:[%s3 + $0x774] sm:$0xff]
    %v360 = vld [vmem:[%s3 + $0x77c] sm:$0xff]
    %v361 = vld [vmem:[%s3 + $0x784] sm:$0xff]
    %v362 = vld [vmem:[%s3 + $0x78c] sm:$0xff]
    %v363 = vld [vmem:[%s3 + $0x794] sm:$0xff]
    %v364 = vld [vmem:[%s3 + $0x79c] sm:$0xff]
    %v365 = vld [vmem:[%s3 + $0x7a4] sm:$0xff]
    %v366 = vld [vmem:[%s3 + $0x7ac] sm:$0xff]
    %v367 = vld [vmem:[%s3 + $0x7b4] sm:$0xf]
    %v368 = vld [vmem:[%s3 + $0x7b8] sm:$0xff]
    %v369 = vld [vmem:[%s3 + $0x7c0] sm:$0xff]
    %v370 = vld [vmem:[%s3 + $0x7c8] sm:$0xff]
    %v371 = vld [vmem:[%s3 + $0x7d0] sm:$0xff]
    %v372 = vld [vmem:[%s3 + $0x7d8] sm:$0xff]
    %v373 = vld [vmem:[%s3 + $0x7e0] sm:$0xff]
    %v374 = vld [vmem:[%s3 + $0x7e8] sm:$0xff]
    %v375 = vld [vmem:[%s3 + $0x7f0] sm:$0xff]
    %v376 = vld [vmem:[%s3 + $0x7f8] sm:$0xff]
    %v377 = vld [vmem:[%s3 + $0x800] sm:$0xf]
    %v378 = vld [vmem:[%s3 + $0x804] sm:$0xff]
    %v379 = vld [vmem:[%s3 + $0x80c] sm:$0xff]
    %v380 = vld [vmem:[%s3 + $0x814] sm:$0xff]
    %v381 = vld [vmem:[%s3 + $0x81c] sm:$0xff]
    %v382 = vld [vmem:[%s3 + $0x824] sm:$0xff]
    %v383 = vld [vmem:[%s3 + $0x82c] sm:$0xff]
    %v384 = vld [vmem:[%s3 + $0x834] sm:$0xff]
    %v385 = vld [vmem:[%s3 + $0x83c] sm:$0xff]
    %v386 = vld [vmem:[%s3 + $0x844] sm:$0xff]
    %v387 = vld [vmem:[%s3 + $0x84c] sm:$0xf]
    %v388 = vld [vmem:[%s3 + $0x850] sm:$0xff]
    %v389 = vld [vmem:[%s3 + $0x858] sm:$0xff]
    %v390 = vld [vmem:[%s3 + $0x860] sm:$0xff]
    %v391 = vld [vmem:[%s3 + $0x868] sm:$0xff]
    %v392 = vld [vmem:[%s3 + $0x870] sm:$0xff]
    %v393 = vld [vmem:[%s3 + $0x878] sm:$0xff]
    %v394 = vld [vmem:[%s3 + $0x880] sm:$0xff]
    %v395 = vld [vmem:[%s3 + $0x888] sm:$0xff]
    %v396 = vld [vmem:[%s3 + $0x890] sm:$0xff]
    %v397 = vld [vmem:[%s3 + $0x898] sm:$0xf]
    %v398 = vld [vmem:[%s3 + $0x89c] sm:$0xff]
    %v399 = vld [vmem:[%s3 + $0x8a4] sm:$0xff]
    %v400 = vld [vmem:[%s3 + $0x8ac] sm:$0xff]
    %v401 = vld [vmem:[%s3 + $0x8b4] sm:$0xff]
    %v402 = vld [vmem:[%s3 + $0x8bc] sm:$0xff]
    %v403 = vld [vmem:[%s3 + $0x8c4] sm:$0xff]
    %v404 = vld [vmem:[%s3 + $0x8cc] sm:$0xff]
    %v405 = vld [vmem:[%s3 + $0x8d4] sm:$0xff]
    %v406 = vld [vmem:[%s3 + $0x8dc] sm:$0xff]
    %v407 = vld [vmem:[%s3 + $0x8e4] sm:$0xf]
    %v408 = vld [vmem:[%s3 + $0x8e8] sm:$0xff]
    %v409 = vld [vmem:[%s3 + $0x8f0] sm:$0xff]
    %v410 = vld [vmem:[%s3 + $0x8f8] sm:$0xff]
    %v411 = vld [vmem:[%s3 + $0x900] sm:$0xff]
    %v412 = vld [vmem:[%s3 + $0x908] sm:$0xff]
    %v413 = vld [vmem:[%s3 + $0x910] sm:$0xff]
    %v414 = vld [vmem:[%s3 + $0x918] sm:$0xff]
    %v415 = vld [vmem:[%s3 + $0x920] sm:$0xff]
    %v416 = vld [vmem:[%s3 + $0x928] sm:$0xff]
    %v417 = vld [vmem:[%s3 + $0x930] sm:$0xf]
    %v418 = vld [vmem:[%s3 + $0x934] sm:$0xff]
    %v419 = vld [vmem:[%s3 + $0x93c] sm:$0xff]
    %v420 = vld [vmem:[%s3 + $0x944] sm:$0xff]
    %v421 = vld [vmem:[%s3 + $0x94c] sm:$0xff]
    %v422 = vld [vmem:[%s3 + $0x954] sm:$0xff]
    %v423 = vld [vmem:[%s3 + $0x95c] sm:$0xff]
    %v424 = vld [vmem:[%s3 + $0x964] sm:$0xff]
    %v425 = vld [vmem:[%s3 + $0x96c] sm:$0xff]
    %v426 = vld [vmem:[%s3 + $0x974] sm:$0xff]
    %v427 = vld [vmem:[%s3 + $0x97c] sm:$0xf]
    %v428 = vld [vmem:[%s4] sm:$0xff]
    %v429 = vld [vmem:[%s4 + $0x8] sm:$0xff]
    %v430 = vld [vmem:[%s4 + $0x10] sm:$0x7]
    %v434 = vlaneseq
    %v435 = vshrl.u32 %v434, 7
    %v436 = vsub.s32 0, %v435
    %v437 = vrot.slane %v428, %v436
    %v438 = vlaneseq
    %v439 = vshrl.u32 %v438, 7
    %v440 = vsub.s32 1, %v439
    %v441 = vrot.slane %v428, %v440
    %v442 = vlaneseq
    %v443 = vshrl.u32 %v442, 7
    %v444 = vsub.s32 2, %v443
    %v445 = vrot.slane %v428, %v444
    %v446 = vlaneseq
    %v447 = vshrl.u32 %v446, 7
    %v448 = vsub.s32 3, %v447
    %v449 = vrot.slane %v428, %v448
    %v450 = vlaneseq
    %v451 = vshrl.u32 %v450, 7
    %v452 = vsub.s32 4, %v451
    %v453 = vrot.slane %v428, %v452
    %v454 = vlaneseq
    %v455 = vshrl.u32 %v454, 7
    %v456 = vsub.s32 5, %v455
    %v457 = vrot.slane %v428, %v456
    %v458 = vlaneseq
    %v459 = vshrl.u32 %v458, 7
    %v460 = vsub.s32 6, %v459
    %v461 = vrot.slane %v428, %v460
    %v462 = vlaneseq
    %v463 = vshrl.u32 %v462, 7
    %v464 = vsub.s32 7, %v463
    %v465 = vrot.slane %v428, %v464
    %v466 = vlaneseq
    %v467 = vshrl.u32 %v466, 7
    %v468 = vsub.s32 0, %v467
    %v469 = vrot.slane %v429, %v468
    %v470 = vlaneseq
    %v471 = vshrl.u32 %v470, 7
    %v472 = vsub.s32 1, %v471
    %v473 = vrot.slane %v429, %v472
    %v474 = vlaneseq
    %v475 = vshrl.u32 %v474, 7
    %v476 = vsub.s32 2, %v475
    %v477 = vrot.slane %v429, %v476
    %v478 = vlaneseq
    %v479 = vshrl.u32 %v478, 7
    %v480 = vsub.s32 3, %v479
    %v481 = vrot.slane %v429, %v480
    %v482 = vlaneseq
    %v483 = vshrl.u32 %v482, 7
    %v484 = vsub.s32 4, %v483
    %v485 = vrot.slane %v429, %v484
    %v486 = vlaneseq
    %v487 = vshrl.u32 %v486, 7
    %v488 = vsub.s32 5, %v487
    %v489 = vrot.slane %v429, %v488
    %v490 = vlaneseq
    %v491 = vshrl.u32 %v490, 7
    %v492 = vsub.s32 6, %v491
    %v493 = vrot.slane %v429, %v492
    %v494 = vlaneseq
    %v495 = vshrl.u32 %v494, 7
    %v496 = vsub.s32 7, %v495
    %v497 = vrot.slane %v429, %v496
    %v498 = vlaneseq
    %v499 = vshrl.u32 %v498, 7
    %v500 = vsub.s32 0, %v499
    %v501 = vrot.slane %v430, %v500
    %v502 = vlaneseq
    %v503 = vshrl.u32 %v502, 7
    %v504 = vsub.s32 1, %v503
    %v505 = vrot.slane %v430, %v504
    %v506 = vlaneseq
    %v507 = vshrl.u32 %v506, 7
    %v508 = vsub.s32 2, %v507
    %v509 = vrot.slane %v430, %v508
    %v849 = vunpack.c.l.b16 %v108
    %v850 = vunpack.c.h.b16 %v108
    %v851 = vunpack.c.l.b16 %v109
    %v852 = vunpack.c.h.b16 %v109
    %v853 = vunpack.c.l.b16 %v110
    %v854 = vunpack.c.h.b16 %v110
    %v855 = vunpack.c.l.b16 %v111
    %v856 = vunpack.c.h.b16 %v111
    %v857 = vunpack.c.l.b16 %v112
    %v858 = vunpack.c.h.b16 %v112
    %v859 = vunpack.c.l.b16 %v113
    %v860 = vunpack.c.h.b16 %v113
    %v861 = vunpack.c.l.b16 %v114
    %v862 = vunpack.c.h.b16 %v114
    %v863 = vunpack.c.l.b16 %v115
    %v864 = vunpack.c.h.b16 %v115
    %v865 = vunpack.c.l.b16 %v116
    %v866 = vunpack.c.h.b16 %v116
    %v867 = vunpack.c.l.b16 %v117
    %v868 = vunpack.c.l.b16 %v118
    %v869 = vunpack.c.h.b16 %v118
    %v870 = vunpack.c.l.b16 %v119
    %v871 = vunpack.c.h.b16 %v119
    %v872 = vunpack.c.l.b16 %v120
    %v873 = vunpack.c.h.b16 %v120
    %v874 = vunpack.c.l.b16 %v121
    %v875 = vunpack.c.h.b16 %v121
    %v876 = vunpack.c.l.b16 %v122
    %v877 = vunpack.c.h.b16 %v122
    %v878 = vunpack.c.l.b16 %v123
    %v879 = vunpack.c.h.b16 %v123
    %v880 = vunpack.c.l.b16 %v124
    %v881 = vunpack.c.h.b16 %v124
    %v882 = vunpack.c.l.b16 %v125
    %v883 = vunpack.c.h.b16 %v125
    %v884 = vunpack.c.l.b16 %v126
    %v885 = vunpack.c.h.b16 %v126
    %v886 = vunpack.c.l.b16 %v127
    %v887 = vunpack.c.l.b16 %v128
    %v888 = vunpack.c.h.b16 %v128
    %v889 = vunpack.c.l.b16 %v129
    %v890 = vunpack.c.h.b16 %v129
    %v891 = vunpack.c.l.b16 %v130
    %v892 = vunpack.c.h.b16 %v130
    %v893 = vunpack.c.l.b16 %v131
    %v894 = vunpack.c.h.b16 %v131
    %v895 = vunpack.c.l.b16 %v132
    %v896 = vunpack.c.h.b16 %v132
    %v897 = vunpack.c.l.b16 %v133
    %v898 = vunpack.c.h.b16 %v133
    %v899 = vunpack.c.l.b16 %v134
    %v900 = vunpack.c.h.b16 %v134
    %v901 = vunpack.c.l.b16 %v135
    %v902 = vunpack.c.h.b16 %v135
    %v903 = vunpack.c.l.b16 %v136
    %v904 = vunpack.c.h.b16 %v136
    %v905 = vunpack.c.l.b16 %v137
    %v906 = vunpack.c.l.b16 %v138
    %v907 = vunpack.c.h.b16 %v138
    %v908 = vunpack.c.l.b16 %v139
    %v909 = vunpack.c.h.b16 %v139
    %v910 = vunpack.c.l.b16 %v140
    %v911 = vunpack.c.h.b16 %v140
    %v912 = vunpack.c.l.b16 %v141
    %v913 = vunpack.c.h.b16 %v141
    %v914 = vunpack.c.l.b16 %v142
    %v915 = vunpack.c.h.b16 %v142
    %v916 = vunpack.c.l.b16 %v143
    %v917 = vunpack.c.h.b16 %v143
    %v918 = vunpack.c.l.b16 %v144
    %v919 = vunpack.c.h.b16 %v144
    %v920 = vunpack.c.l.b16 %v145
    %v921 = vunpack.c.h.b16 %v145
    %v922 = vunpack.c.l.b16 %v146
    %v923 = vunpack.c.h.b16 %v146
    %v924 = vunpack.c.l.b16 %v147
    %v925 = vunpack.c.l.b16 %v148
    %v926 = vunpack.c.h.b16 %v148
    %v927 = vunpack.c.l.b16 %v149
    %v928 = vunpack.c.h.b16 %v149
    %v929 = vunpack.c.l.b16 %v150
    %v930 = vunpack.c.h.b16 %v150
    %v931 = vunpack.c.l.b16 %v151
    %v932 = vunpack.c.h.b16 %v151
    %v933 = vunpack.c.l.b16 %v152
    %v934 = vunpack.c.h.b16 %v152
    %v935 = vunpack.c.l.b16 %v153
    %v936 = vunpack.c.h.b16 %v153
    %v937 = vunpack.c.l.b16 %v154
    %v938 = vunpack.c.h.b16 %v154
    %v939 = vunpack.c.l.b16 %v155
    %v940 = vunpack.c.h.b16 %v155
    %v941 = vunpack.c.l.b16 %v156
    %v942 = vunpack.c.h.b16 %v156
    %v943 = vunpack.c.l.b16 %v157
    %v944 = vunpack.c.l.b16 %v158
    %v945 = vunpack.c.h.b16 %v158
    %v946 = vunpack.c.l.b16 %v159
    %v947 = vunpack.c.h.b16 %v159
    %v948 = vunpack.c.l.b16 %v160
    %v949 = vunpack.c.h.b16 %v160
    %v950 = vunpack.c.l.b16 %v161
    %v951 = vunpack.c.h.b16 %v161
    %v952 = vunpack.c.l.b16 %v162
    %v953 = vunpack.c.h.b16 %v162
    %v954 = vunpack.c.l.b16 %v163
    %v955 = vunpack.c.h.b16 %v163
    %v956 = vunpack.c.l.b16 %v164
    %v957 = vunpack.c.h.b16 %v164
    %v958 = vunpack.c.l.b16 %v165
    %v959 = vunpack.c.h.b16 %v165
    %v960 = vunpack.c.l.b16 %v166
    %v961 = vunpack.c.h.b16 %v166
    %v962 = vunpack.c.l.b16 %v167
    %v963 = vunpack.c.l.b16 %v168
    %v964 = vunpack.c.h.b16 %v168
    %v965 = vunpack.c.l.b16 %v169
    %v966 = vunpack.c.h.b16 %v169
    %v967 = vunpack.c.l.b16 %v170
    %v968 = vunpack.c.h.b16 %v170
    %v969 = vunpack.c.l.b16 %v171
    %v970 = vunpack.c.h.b16 %v171
    %v971 = vunpack.c.l.b16 %v172
    %v972 = vunpack.c.h.b16 %v172
    %v973 = vunpack.c.l.b16 %v173
    %v974 = vunpack.c.h.b16 %v173
    %v975 = vunpack.c.l.b16 %v174
    %v976 = vunpack.c.h.b16 %v174
    %v977 = vunpack.c.l.b16 %v175
    %v978 = vunpack.c.h.b16 %v175
    %v979 = vunpack.c.l.b16 %v176
    %v980 = vunpack.c.h.b16 %v176
    %v981 = vunpack.c.l.b16 %v177
    %v982 = vunpack.c.l.b16 %v178
    %v983 = vunpack.c.h.b16 %v178
    %v984 = vunpack.c.l.b16 %v179
    %v985 = vunpack.c.h.b16 %v179
    %v986 = vunpack.c.l.b16 %v180
    %v987 = vunpack.c.h.b16 %v180
    %v988 = vunpack.c.l.b16 %v181
    %v989 = vunpack.c.h.b16 %v181
    %v990 = vunpack.c.l.b16 %v182
    %v991 = vunpack.c.h.b16 %v182
    %v992 = vunpack.c.l.b16 %v183
    %v993 = vunpack.c.h.b16 %v183
    %v994 = vunpack.c.l.b16 %v184
    %v995 = vunpack.c.h.b16 %v184
    %v996 = vunpack.c.l.b16 %v185
    %v997 = vunpack.c.h.b16 %v185
    %v998 = vunpack.c.l.b16 %v186
    %v999 = vunpack.c.h.b16 %v186
    %v1000 = vunpack.c.l.b16 %v187
    %v1001 = vunpack.c.l.b16 %v188
    %v1002 = vunpack.c.h.b16 %v188
    %v1003 = vunpack.c.l.b16 %v189
    %v1004 = vunpack.c.h.b16 %v189
    %v1005 = vunpack.c.l.b16 %v190
    %v1006 = vunpack.c.h.b16 %v190
    %v1007 = vunpack.c.l.b16 %v191
    %v1008 = vunpack.c.h.b16 %v191
    %v1009 = vunpack.c.l.b16 %v192
    %v1010 = vunpack.c.h.b16 %v192
    %v1011 = vunpack.c.l.b16 %v193
    %v1012 = vunpack.c.h.b16 %v193
    %v1013 = vunpack.c.l.b16 %v194
    %v1014 = vunpack.c.h.b16 %v194
    %v1015 = vunpack.c.l.b16 %v195
    %v1016 = vunpack.c.h.b16 %v195
    %v1017 = vunpack.c.l.b16 %v196
    %v1018 = vunpack.c.h.b16 %v196
    %v1019 = vunpack.c.l.b16 %v197
    %v1020 = vunpack.c.l.b16 %v198
    %v1021 = vunpack.c.h.b16 %v198
    %v1022 = vunpack.c.l.b16 %v199
    %v1023 = vunpack.c.h.b16 %v199
    %v1024 = vunpack.c.l.b16 %v200
    %v1025 = vunpack.c.h.b16 %v200
    %v1026 = vunpack.c.l.b16 %v201
    %v1027 = vunpack.c.h.b16 %v201
    %v1028 = vunpack.c.l.b16 %v202
    %v1029 = vunpack.c.h.b16 %v202
    %v1030 = vunpack.c.l.b16 %v203
    %v1031 = vunpack.c.h.b16 %v203
    %v1032 = vunpack.c.l.b16 %v204
    %v1033 = vunpack.c.h.b16 %v204
    %v1034 = vunpack.c.l.b16 %v205
    %v1035 = vunpack.c.h.b16 %v205
    %v1036 = vunpack.c.l.b16 %v206
    %v1037 = vunpack.c.h.b16 %v206
    %v1038 = vunpack.c.l.b16 %v207
    %v1039 = vunpack.c.l.b16 %v208
    %v1040 = vunpack.c.h.b16 %v208
    %v1041 = vunpack.c.l.b16 %v209
    %v1042 = vunpack.c.h.b16 %v209
    %v1043 = vunpack.c.l.b16 %v210
    %v1044 = vunpack.c.h.b16 %v210
    %v1045 = vunpack.c.l.b16 %v211
    %v1046 = vunpack.c.h.b16 %v211
    %v1047 = vunpack.c.l.b16 %v212
    %v1048 = vunpack.c.h.b16 %v212
    %v1049 = vunpack.c.l.b16 %v213
    %v1050 = vunpack.c.h.b16 %v213
    %v1051 = vunpack.c.l.b16 %v214
    %v1052 = vunpack.c.h.b16 %v214
    %v1053 = vunpack.c.l.b16 %v215
    %v1054 = vunpack.c.h.b16 %v215
    %v1055 = vunpack.c.l.b16 %v216
    %v1056 = vunpack.c.h.b16 %v216
    %v1057 = vunpack.c.l.b16 %v217
    %v1058 = vunpack.c.l.b16 %v218
    %v1059 = vunpack.c.h.b16 %v218
    %v1060 = vunpack.c.l.b16 %v219
    %v1061 = vunpack.c.h.b16 %v219
    %v1062 = vunpack.c.l.b16 %v220
    %v1063 = vunpack.c.h.b16 %v220
    %v1064 = vunpack.c.l.b16 %v221
    %v1065 = vunpack.c.h.b16 %v221
    %v1066 = vunpack.c.l.b16 %v222
    %v1067 = vunpack.c.h.b16 %v222
    %v1068 = vunpack.c.l.b16 %v223
    %v1069 = vunpack.c.h.b16 %v223
    %v1070 = vunpack.c.l.b16 %v224
    %v1071 = vunpack.c.h.b16 %v224
    %v1072 = vunpack.c.l.b16 %v225
    %v1073 = vunpack.c.h.b16 %v225
    %v1074 = vunpack.c.l.b16 %v226
    %v1075 = vunpack.c.h.b16 %v226
    %v1076 = vunpack.c.l.b16 %v227
    %v1077 = vunpack.c.l.b16 %v228
    %v1078 = vunpack.c.h.b16 %v228
    %v1079 = vunpack.c.l.b16 %v229
    %v1080 = vunpack.c.h.b16 %v229
    %v1081 = vunpack.c.l.b16 %v230
    %v1082 = vunpack.c.h.b16 %v230
    %v1083 = vunpack.c.l.b16 %v231
    %v1084 = vunpack.c.h.b16 %v231
    %v1085 = vunpack.c.l.b16 %v232
    %v1086 = vunpack.c.h.b16 %v232
    %v1087 = vunpack.c.l.b16 %v233
    %v1088 = vunpack.c.h.b16 %v233
    %v1089 = vunpack.c.l.b16 %v234
    %v1090 = vunpack.c.h.b16 %v234
    %v1091 = vunpack.c.l.b16 %v235
    %v1092 = vunpack.c.h.b16 %v235
    %v1093 = vunpack.c.l.b16 %v236
    %v1094 = vunpack.c.h.b16 %v236
    %v1095 = vunpack.c.l.b16 %v237
    %v1096 = vunpack.c.l.b16 %v238
    %v1097 = vunpack.c.h.b16 %v238
    %v1098 = vunpack.c.l.b16 %v239
    %v1099 = vunpack.c.h.b16 %v239
    %v1100 = vunpack.c.l.b16 %v240
    %v1101 = vunpack.c.h.b16 %v240
    %v1102 = vunpack.c.l.b16 %v241
    %v1103 = vunpack.c.h.b16 %v241
    %v1104 = vunpack.c.l.b16 %v242
    %v1105 = vunpack.c.h.b16 %v242
    %v1106 = vunpack.c.l.b16 %v243
    %v1107 = vunpack.c.h.b16 %v243
    %v1108 = vunpack.c.l.b16 %v244
    %v1109 = vunpack.c.h.b16 %v244
    %v1110 = vunpack.c.l.b16 %v245
    %v1111 = vunpack.c.h.b16 %v245
    %v1112 = vunpack.c.l.b16 %v246
    %v1113 = vunpack.c.h.b16 %v246
    %v1114 = vunpack.c.l.b16 %v247
    %v1115 = vunpack.c.l.b16 %v248
    %v1116 = vunpack.c.h.b16 %v248
    %v1117 = vunpack.c.l.b16 %v249
    %v1118 = vunpack.c.h.b16 %v249
    %v1119 = vunpack.c.l.b16 %v250
    %v1120 = vunpack.c.h.b16 %v250
    %v1121 = vunpack.c.l.b16 %v251
    %v1122 = vunpack.c.h.b16 %v251
    %v1123 = vunpack.c.l.b16 %v252
    %v1124 = vunpack.c.h.b16 %v252
    %v1125 = vunpack.c.l.b16 %v253
    %v1126 = vunpack.c.h.b16 %v253
    %v1127 = vunpack.c.l.b16 %v254
    %v1128 = vunpack.c.h.b16 %v254
    %v1129 = vunpack.c.l.b16 %v255
    %v1130 = vunpack.c.h.b16 %v255
    %v1131 = vunpack.c.l.b16 %v256
    %v1132 = vunpack.c.h.b16 %v256
    %v1133 = vunpack.c.l.b16 %v257
    %v1134 = vunpack.c.l.b16 %v258
    %v1135 = vunpack.c.h.b16 %v258
    %v1136 = vunpack.c.l.b16 %v259
    %v1137 = vunpack.c.h.b16 %v259
    %v1138 = vunpack.c.l.b16 %v260
    %v1139 = vunpack.c.h.b16 %v260
    %v1140 = vunpack.c.l.b16 %v261
    %v1141 = vunpack.c.h.b16 %v261
    %v1142 = vunpack.c.l.b16 %v262
    %v1143 = vunpack.c.h.b16 %v262
    %v1144 = vunpack.c.l.b16 %v263
    %v1145 = vunpack.c.h.b16 %v263
    %v1146 = vunpack.c.l.b16 %v264
    %v1147 = vunpack.c.h.b16 %v264
    %v1148 = vunpack.c.l.b16 %v265
    %v1149 = vunpack.c.h.b16 %v265
    %v1150 = vunpack.c.l.b16 %v266
    %v1151 = vunpack.c.h.b16 %v266
    %v1152 = vunpack.c.l.b16 %v267
    %v1153 = vunpack.c.l.b16 %v268
    %v1154 = vunpack.c.h.b16 %v268
    %v1155 = vunpack.c.l.b16 %v269
    %v1156 = vunpack.c.h.b16 %v269
    %v1157 = vunpack.c.l.b16 %v270
    %v1158 = vunpack.c.h.b16 %v270
    %v1159 = vunpack.c.l.b16 %v271
    %v1160 = vunpack.c.h.b16 %v271
    %v1161 = vunpack.c.l.b16 %v272
    %v1162 = vunpack.c.h.b16 %v272
    %v1163 = vunpack.c.l.b16 %v273
    %v1164 = vunpack.c.h.b16 %v273
    %v1165 = vunpack.c.l.b16 %v274
    %v1166 = vunpack.c.h.b16 %v274
    %v1167 = vunpack.c.l.b16 %v275
    %v1168 = vunpack.c.h.b16 %v275
    %v1169 = vunpack.c.l.b16 %v276
    %v1170 = vunpack.c.h.b16 %v276
    %v1171 = vunpack.c.l.b16 %v277
    %v1172 = vunpack.c.l.b16 %v278
    %v1173 = vunpack.c.h.b16 %v278
    %v1174 = vunpack.c.l.b16 %v279
    %v1175 = vunpack.c.h.b16 %v279
    %v1176 = vunpack.c.l.b16 %v280
    %v1177 = vunpack.c.h.b16 %v280
    %v1178 = vunpack.c.l.b16 %v281
    %v1179 = vunpack.c.h.b16 %v281
    %v1180 = vunpack.c.l.b16 %v282
    %v1181 = vunpack.c.h.b16 %v282
    %v1182 = vunpack.c.l.b16 %v283
    %v1183 = vunpack.c.h.b16 %v283
    %v1184 = vunpack.c.l.b16 %v284
    %v1185 = vunpack.c.h.b16 %v284
    %v1186 = vunpack.c.l.b16 %v285
    %v1187 = vunpack.c.h.b16 %v285
    %v1188 = vunpack.c.l.b16 %v286
    %v1189 = vunpack.c.h.b16 %v286
    %v1190 = vunpack.c.l.b16 %v287
    %v1191 = vunpack.c.l.b16 %v288
    %v1192 = vunpack.c.h.b16 %v288
    %v1193 = vunpack.c.l.b16 %v289
    %v1194 = vunpack.c.h.b16 %v289
    %v1195 = vunpack.c.l.b16 %v290
    %v1196 = vunpack.c.h.b16 %v290
    %v1197 = vunpack.c.l.b16 %v291
    %v1198 = vunpack.c.h.b16 %v291
    %v1199 = vunpack.c.l.b16 %v292
    %v1200 = vunpack.c.h.b16 %v292
    %v1201 = vunpack.c.l.b16 %v293
    %v1202 = vunpack.c.h.b16 %v293
    %v1203 = vunpack.c.l.b16 %v294
    %v1204 = vunpack.c.h.b16 %v294
    %v1205 = vunpack.c.l.b16 %v295
    %v1206 = vunpack.c.h.b16 %v295
    %v1207 = vunpack.c.l.b16 %v296
    %v1208 = vunpack.c.h.b16 %v296
    %v1209 = vunpack.c.l.b16 %v297
    %v1210 = vunpack.c.l.b16 %v298
    %v1211 = vunpack.c.h.b16 %v298
    %v1212 = vunpack.c.l.b16 %v299
    %v1213 = vunpack.c.h.b16 %v299
    %v1214 = vunpack.c.l.b16 %v300
    %v1215 = vunpack.c.h.b16 %v300
    %v1216 = vunpack.c.l.b16 %v301
    %v1217 = vunpack.c.h.b16 %v301
    %v1218 = vunpack.c.l.b16 %v302
    %v1219 = vunpack.c.h.b16 %v302
    %v1220 = vunpack.c.l.b16 %v303
    %v1221 = vunpack.c.h.b16 %v303
    %v1222 = vunpack.c.l.b16 %v304
    %v1223 = vunpack.c.h.b16 %v304
    %v1224 = vunpack.c.l.b16 %v305
    %v1225 = vunpack.c.h.b16 %v305
    %v1226 = vunpack.c.l.b16 %v306
    %v1227 = vunpack.c.h.b16 %v306
    %v1228 = vunpack.c.l.b16 %v307
    %v1229 = vunpack.c.l.b16 %v308
    %v1230 = vunpack.c.h.b16 %v308
    %v1231 = vunpack.c.l.b16 %v309
    %v1232 = vunpack.c.h.b16 %v309
    %v1233 = vunpack.c.l.b16 %v310
    %v1234 = vunpack.c.h.b16 %v310
    %v1235 = vunpack.c.l.b16 %v311
    %v1236 = vunpack.c.h.b16 %v311
    %v1237 = vunpack.c.l.b16 %v312
    %v1238 = vunpack.c.h.b16 %v312
    %v1239 = vunpack.c.l.b16 %v313
    %v1240 = vunpack.c.h.b16 %v313
    %v1241 = vunpack.c.l.b16 %v314
    %v1242 = vunpack.c.h.b16 %v314
    %v1243 = vunpack.c.l.b16 %v315
    %v1244 = vunpack.c.h.b16 %v315
    %v1245 = vunpack.c.l.b16 %v316
    %v1246 = vunpack.c.h.b16 %v316
    %v1247 = vunpack.c.l.b16 %v317
    %v1248 = vunpack.c.l.b16 %v318
    %v1249 = vunpack.c.h.b16 %v318
    %v1250 = vunpack.c.l.b16 %v319
    %v1251 = vunpack.c.h.b16 %v319
    %v1252 = vunpack.c.l.b16 %v320
    %v1253 = vunpack.c.h.b16 %v320
    %v1254 = vunpack.c.l.b16 %v321
    %v1255 = vunpack.c.h.b16 %v321
    %v1256 = vunpack.c.l.b16 %v322
    %v1257 = vunpack.c.h.b16 %v322
    %v1258 = vunpack.c.l.b16 %v323
    %v1259 = vunpack.c.h.b16 %v323
    %v1260 = vunpack.c.l.b16 %v324
    %v1261 = vunpack.c.h.b16 %v324
    %v1262 = vunpack.c.l.b16 %v325
    %v1263 = vunpack.c.h.b16 %v325
    %v1264 = vunpack.c.l.b16 %v326
    %v1265 = vunpack.c.h.b16 %v326
    %v1266 = vunpack.c.l.b16 %v327
    %v1267 = vunpack.c.l.b16 %v328
    %v1268 = vunpack.c.h.b16 %v328
    %v1269 = vunpack.c.l.b16 %v329
    %v1270 = vunpack.c.h.b16 %v329
    %v1271 = vunpack.c.l.b16 %v330
    %v1272 = vunpack.c.h.b16 %v330
    %v1273 = vunpack.c.l.b16 %v331
    %v1274 = vunpack.c.h.b16 %v331
    %v1275 = vunpack.c.l.b16 %v332
    %v1276 = vunpack.c.h.b16 %v332
    %v1277 = vunpack.c.l.b16 %v333
    %v1278 = vunpack.c.h.b16 %v333
    %v1279 = vunpack.c.l.b16 %v334
    %v1280 = vunpack.c.h.b16 %v334
    %v1281 = vunpack.c.l.b16 %v335
    %v1282 = vunpack.c.h.b16 %v335
    %v1283 = vunpack.c.l.b16 %v336
    %v1284 = vunpack.c.h.b16 %v336
    %v1285 = vunpack.c.l.b16 %v337
    %v1286 = vunpack.c.l.b16 %v338
    %v1287 = vunpack.c.h.b16 %v338
    %v1288 = vunpack.c.l.b16 %v339
    %v1289 = vunpack.c.h.b16 %v339
    %v1290 = vunpack.c.l.b16 %v340
    %v1291 = vunpack.c.h.b16 %v340
    %v1292 = vunpack.c.l.b16 %v341
    %v1293 = vunpack.c.h.b16 %v341
    %v1294 = vunpack.c.l.b16 %v342
    %v1295 = vunpack.c.h.b16 %v342
    %v1296 = vunpack.c.l.b16 %v343
    %v1297 = vunpack.c.h.b16 %v343
    %v1298 = vunpack.c.l.b16 %v344
    %v1299 = vunpack.c.h.b16 %v344
    %v1300 = vunpack.c.l.b16 %v345
    %v1301 = vunpack.c.h.b16 %v345
    %v1302 = vunpack.c.l.b16 %v346
    %v1303 = vunpack.c.h.b16 %v346
    %v1304 = vunpack.c.l.b16 %v347
    %v1305 = vunpack.c.l.b16 %v348
    %v1306 = vunpack.c.h.b16 %v348
    %v1307 = vunpack.c.l.b16 %v349
    %v1308 = vunpack.c.h.b16 %v349
    %v1309 = vunpack.c.l.b16 %v350
    %v1310 = vunpack.c.h.b16 %v350
    %v1311 = vunpack.c.l.b16 %v351
    %v1312 = vunpack.c.h.b16 %v351
    %v1313 = vunpack.c.l.b16 %v352
    %v1314 = vunpack.c.h.b16 %v352
    %v1315 = vunpack.c.l.b16 %v353
    %v1316 = vunpack.c.h.b16 %v353
    %v1317 = vunpack.c.l.b16 %v354
    %v1318 = vunpack.c.h.b16 %v354
    %v1319 = vunpack.c.l.b16 %v355
    %v1320 = vunpack.c.h.b16 %v355
    %v1321 = vunpack.c.l.b16 %v356
    %v1322 = vunpack.c.h.b16 %v356
    %v1323 = vunpack.c.l.b16 %v357
    %v1324 = vunpack.c.l.b16 %v358
    %v1325 = vunpack.c.h.b16 %v358
    %v1326 = vunpack.c.l.b16 %v359
    %v1327 = vunpack.c.h.b16 %v359
    %v1328 = vunpack.c.l.b16 %v360
    %v1329 = vunpack.c.h.b16 %v360
    %v1330 = vunpack.c.l.b16 %v361
    %v1331 = vunpack.c.h.b16 %v361
    %v1332 = vunpack.c.l.b16 %v362
    %v1333 = vunpack.c.h.b16 %v362
    %v1334 = vunpack.c.l.b16 %v363
    %v1335 = vunpack.c.h.b16 %v363
    %v1336 = vunpack.c.l.b16 %v364
    %v1337 = vunpack.c.h.b16 %v364
    %v1338 = vunpack.c.l.b16 %v365
    %v1339 = vunpack.c.h.b16 %v365
    %v1340 = vunpack.c.l.b16 %v366
    %v1341 = vunpack.c.h.b16 %v366
    %v1342 = vunpack.c.l.b16 %v367
    %v1343 = vunpack.c.l.b16 %v368
    %v1344 = vunpack.c.h.b16 %v368
    %v1345 = vunpack.c.l.b16 %v369
    %v1346 = vunpack.c.h.b16 %v369
    %v1347 = vunpack.c.l.b16 %v370
    %v1348 = vunpack.c.h.b16 %v370
    %v1349 = vunpack.c.l.b16 %v371
    %v1350 = vunpack.c.h.b16 %v371
    %v1351 = vunpack.c.l.b16 %v372
    %v1352 = vunpack.c.h.b16 %v372
    %v1353 = vunpack.c.l.b16 %v373
    %v1354 = vunpack.c.h.b16 %v373
    %v1355 = vunpack.c.l.b16 %v374
    %v1356 = vunpack.c.h.b16 %v374
    %v1357 = vunpack.c.l.b16 %v375
    %v1358 = vunpack.c.h.b16 %v375
    %v1359 = vunpack.c.l.b16 %v376
    %v1360 = vunpack.c.h.b16 %v376
    %v1361 = vunpack.c.l.b16 %v377
    %v1362 = vunpack.c.l.b16 %v378
    %v1363 = vunpack.c.h.b16 %v378
    %v1364 = vunpack.c.l.b16 %v379
    %v1365 = vunpack.c.h.b16 %v379
    %v1366 = vunpack.c.l.b16 %v380
    %v1367 = vunpack.c.h.b16 %v380
    %v1368 = vunpack.c.l.b16 %v381
    %v1369 = vunpack.c.h.b16 %v381
    %v1370 = vunpack.c.l.b16 %v382
    %v1371 = vunpack.c.h.b16 %v382
    %v1372 = vunpack.c.l.b16 %v383
    %v1373 = vunpack.c.h.b16 %v383
    %v1374 = vunpack.c.l.b16 %v384
    %v1375 = vunpack.c.h.b16 %v384
    %v1376 = vunpack.c.l.b16 %v385
    %v1377 = vunpack.c.h.b16 %v385
    %v1378 = vunpack.c.l.b16 %v386
    %v1379 = vunpack.c.h.b16 %v386
    %v1380 = vunpack.c.l.b16 %v387
    %v1381 = vunpack.c.l.b16 %v388
    %v1382 = vunpack.c.h.b16 %v388
    %v1383 = vunpack.c.l.b16 %v389
    %v1384 = vunpack.c.h.b16 %v389
    %v1385 = vunpack.c.l.b16 %v390
    %v1386 = vunpack.c.h.b16 %v390
    %v1387 = vunpack.c.l.b16 %v391
    %v1388 = vunpack.c.h.b16 %v391
    %v1389 = vunpack.c.l.b16 %v392
    %v1390 = vunpack.c.h.b16 %v392
    %v1391 = vunpack.c.l.b16 %v393
    %v1392 = vunpack.c.h.b16 %v393
    %v1393 = vunpack.c.l.b16 %v394
    %v1394 = vunpack.c.h.b16 %v394
    %v1395 = vunpack.c.l.b16 %v395
    %v1396 = vunpack.c.h.b16 %v395
    %v1397 = vunpack.c.l.b16 %v396
    %v1398 = vunpack.c.h.b16 %v396
    %v1399 = vunpack.c.l.b16 %v397
    %v1400 = vunpack.c.l.b16 %v398
    %v1401 = vunpack.c.h.b16 %v398
    %v1402 = vunpack.c.l.b16 %v399
    %v1403 = vunpack.c.h.b16 %v399
    %v1404 = vunpack.c.l.b16 %v400
    %v1405 = vunpack.c.h.b16 %v400
    %v1406 = vunpack.c.l.b16 %v401
    %v1407 = vunpack.c.h.b16 %v401
    %v1408 = vunpack.c.l.b16 %v402
    %v1409 = vunpack.c.h.b16 %v402
    %v1410 = vunpack.c.l.b16 %v403
    %v1411 = vunpack.c.h.b16 %v403
    %v1412 = vunpack.c.l.b16 %v404
    %v1413 = vunpack.c.h.b16 %v404
    %v1414 = vunpack.c.l.b16 %v405
    %v1415 = vunpack.c.h.b16 %v405
    %v1416 = vunpack.c.l.b16 %v406
    %v1417 = vunpack.c.h.b16 %v406
    %v1418 = vunpack.c.l.b16 %v407
    %v1419 = vunpack.c.l.b16 %v408
    %v1420 = vunpack.c.h.b16 %v408
    %v1421 = vunpack.c.l.b16 %v409
    %v1422 = vunpack.c.h.b16 %v409
    %v1423 = vunpack.c.l.b16 %v410
    %v1424 = vunpack.c.h.b16 %v410
    %v1425 = vunpack.c.l.b16 %v411
    %v1426 = vunpack.c.h.b16 %v411
    %v1427 = vunpack.c.l.b16 %v412
    %v1428 = vunpack.c.h.b16 %v412
    %v1429 = vunpack.c.l.b16 %v413
    %v1430 = vunpack.c.h.b16 %v413
    %v1431 = vunpack.c.l.b16 %v414
    %v1432 = vunpack.c.h.b16 %v414
    %v1433 = vunpack.c.l.b16 %v415
    %v1434 = vunpack.c.h.b16 %v415
    %v1435 = vunpack.c.l.b16 %v416
    %v1436 = vunpack.c.h.b16 %v416
    %v1437 = vunpack.c.l.b16 %v417
    %v1438 = vunpack.c.l.b16 %v418
    %v1439 = vunpack.c.h.b16 %v418
    %v1440 = vunpack.c.l.b16 %v419
    %v1441 = vunpack.c.h.b16 %v419
    %v1442 = vunpack.c.l.b16 %v420
    %v1443 = vunpack.c.h.b16 %v420
    %v1444 = vunpack.c.l.b16 %v421
    %v1445 = vunpack.c.h.b16 %v421
    %v1446 = vunpack.c.l.b16 %v422
    %v1447 = vunpack.c.h.b16 %v422
    %v1448 = vunpack.c.l.b16 %v423
    %v1449 = vunpack.c.h.b16 %v423
    %v1450 = vunpack.c.l.b16 %v424
    %v1451 = vunpack.c.h.b16 %v424
    %v1452 = vunpack.c.l.b16 %v425
    %v1453 = vunpack.c.h.b16 %v425
    %v1454 = vunpack.c.l.b16 %v426
    %v1455 = vunpack.c.h.b16 %v426
    %v1456 = vunpack.c.l.b16 %v427
    %v1457 = vpack.c.b16 %v868, %v849
    %v1458 = vpack.c.b16 %v869, %v850
    %v1459 = vpack.c.b16 %v870, %v851
    %v1460 = vpack.c.b16 %v871, %v852
    %v1461 = vpack.c.b16 %v872, %v853
    %v1462 = vpack.c.b16 %v873, %v854
    %v1463 = vpack.c.b16 %v874, %v855
    %v1464 = vpack.c.b16 %v875, %v856
    %v1465 = vpack.c.b16 %v876, %v857
    %v1466 = vpack.c.b16 %v877, %v858
    %v1467 = vpack.c.b16 %v878, %v859
    %v1468 = vpack.c.b16 %v879, %v860
    %v1469 = vpack.c.b16 %v880, %v861
    %v1470 = vpack.c.b16 %v881, %v862
    %v1471 = vpack.c.b16 %v882, %v863
    %v1472 = vpack.c.b16 %v883, %v864
    %v1473 = vpack.c.b16 %v884, %v865
    %v1474 = vpack.c.b16 %v885, %v866
    %v1475 = vpack.c.b16 %v886, %v867
    %v1476 = vpack.c.b16 %v906, %v887
    %v1477 = vpack.c.b16 %v907, %v888
    %v1478 = vpack.c.b16 %v908, %v889
    %v1479 = vpack.c.b16 %v909, %v890
    %v1480 = vpack.c.b16 %v910, %v891
    %v1481 = vpack.c.b16 %v911, %v892
    %v1482 = vpack.c.b16 %v912, %v893
    %v1483 = vpack.c.b16 %v913, %v894
    %v1484 = vpack.c.b16 %v914, %v895
    %v1485 = vpack.c.b16 %v915, %v896
    %v1486 = vpack.c.b16 %v916, %v897
    %v1487 = vpack.c.b16 %v917, %v898
    %v1488 = vpack.c.b16 %v918, %v899
    %v1489 = vpack.c.b16 %v919, %v900
    %v1490 = vpack.c.b16 %v920, %v901
    %v1491 = vpack.c.b16 %v921, %v902
    %v1492 = vpack.c.b16 %v922, %v903
    %v1493 = vpack.c.b16 %v923, %v904
    %v1494 = vpack.c.b16 %v924, %v905
    %v1495 = vpack.c.b16 %v944, %v925
    %v1496 = vpack.c.b16 %v945, %v926
    %v1497 = vpack.c.b16 %v946, %v927
    %v1498 = vpack.c.b16 %v947, %v928
    %v1499 = vpack.c.b16 %v948, %v929
    %v1500 = vpack.c.b16 %v949, %v930
    %v1501 = vpack.c.b16 %v950, %v931
    %v1502 = vpack.c.b16 %v951, %v932
    %v1503 = vpack.c.b16 %v952, %v933
    %v1504 = vpack.c.b16 %v953, %v934
    %v1505 = vpack.c.b16 %v954, %v935
    %v1506 = vpack.c.b16 %v955, %v936
    %v1507 = vpack.c.b16 %v956, %v937
    %v1508 = vpack.c.b16 %v957, %v938
    %v1509 = vpack.c.b16 %v958, %v939
    %v1510 = vpack.c.b16 %v959, %v940
    %v1511 = vpack.c.b16 %v960, %v941
    %v1512 = vpack.c.b16 %v961, %v942
    %v1513 = vpack.c.b16 %v962, %v943
    %v1514 = vpack.c.b16 %v982, %v963
    %v1515 = vpack.c.b16 %v983, %v964
    %v1516 = vpack.c.b16 %v984, %v965
    %v1517 = vpack.c.b16 %v985, %v966
    %v1518 = vpack.c.b16 %v986, %v967
    %v1519 = vpack.c.b16 %v987, %v968
    %v1520 = vpack.c.b16 %v988, %v969
    %v1521 = vpack.c.b16 %v989, %v970
    %v1522 = vpack.c.b16 %v990, %v971
    %v1523 = vpack.c.b16 %v991, %v972
    %v1524 = vpack.c.b16 %v992, %v973
    %v1525 = vpack.c.b16 %v993, %v974
    %v1526 = vpack.c.b16 %v994, %v975
    %v1527 = vpack.c.b16 %v995, %v976
    %v1528 = vpack.c.b16 %v996, %v977
    %v1529 = vpack.c.b16 %v997, %v978
    %v1530 = vpack.c.b16 %v998, %v979
    %v1531 = vpack.c.b16 %v999, %v980
    %v1532 = vpack.c.b16 %v1000, %v981
    %v1533 = vpack.c.b16 %v1020, %v1001
    %v1534 = vpack.c.b16 %v1021, %v1002
    %v1535 = vpack.c.b16 %v1022, %v1003
    %v1536 = vpack.c.b16 %v1023, %v1004
    %v1537 = vpack.c.b16 %v1024, %v1005
    %v1538 = vpack.c.b16 %v1025, %v1006
    %v1539 = vpack.c.b16 %v1026, %v1007
    %v1540 = vpack.c.b16 %v1027, %v1008
    %v1541 = vpack.c.b16 %v1028, %v1009
    %v1542 = vpack.c.b16 %v1029, %v1010
    %v1543 = vpack.c.b16 %v1030, %v1011
    %v1544 = vpack.c.b16 %v1031, %v1012
    %v1545 = vpack.c.b16 %v1032, %v1013
    %v1546 = vpack.c.b16 %v1033, %v1014
    %v1547 = vpack.c.b16 %v1034, %v1015
    %v1548 = vpack.c.b16 %v1035, %v1016
    %v1549 = vpack.c.b16 %v1036, %v1017
    %v1550 = vpack.c.b16 %v1037, %v1018
    %v1551 = vpack.c.b16 %v1038, %v1019
    %v1552 = vpack.c.b16 %v1058, %v1039
    %v1553 = vpack.c.b16 %v1059, %v1040
    %v1554 = vpack.c.b16 %v1060, %v1041
    %v1555 = vpack.c.b16 %v1061, %v1042
    %v1556 = vpack.c.b16 %v1062, %v1043
    %v1557 = vpack.c.b16 %v1063, %v1044
    %v1558 = vpack.c.b16 %v1064, %v1045
    %v1559 = vpack.c.b16 %v1065, %v1046
    %v1560 = vpack.c.b16 %v1066, %v1047
    %v1561 = vpack.c.b16 %v1067, %v1048
    %v1562 = vpack.c.b16 %v1068, %v1049
    %v1563 = vpack.c.b16 %v1069, %v1050
    %v1564 = vpack.c.b16 %v1070, %v1051
    %v1565 = vpack.c.b16 %v1071, %v1052
    %v1566 = vpack.c.b16 %v1072, %v1053
    %v1567 = vpack.c.b16 %v1073, %v1054
    %v1568 = vpack.c.b16 %v1074, %v1055
    %v1569 = vpack.c.b16 %v1075, %v1056
    %v1570 = vpack.c.b16 %v1076, %v1057
    %v1571 = vpack.c.b16 %v1096, %v1077
    %v1572 = vpack.c.b16 %v1097, %v1078
    %v1573 = vpack.c.b16 %v1098, %v1079
    %v1574 = vpack.c.b16 %v1099, %v1080
    %v1575 = vpack.c.b16 %v1100, %v1081
    %v1576 = vpack.c.b16 %v1101, %v1082
    %v1577 = vpack.c.b16 %v1102, %v1083
    %v1578 = vpack.c.b16 %v1103, %v1084
    %v1579 = vpack.c.b16 %v1104, %v1085
    %v1580 = vpack.c.b16 %v1105, %v1086
    %v1581 = vpack.c.b16 %v1106, %v1087
    %v1582 = vpack.c.b16 %v1107, %v1088
    %v1583 = vpack.c.b16 %v1108, %v1089
    %v1584 = vpack.c.b16 %v1109, %v1090
    %v1585 = vpack.c.b16 %v1110, %v1091
    %v1586 = vpack.c.b16 %v1111, %v1092
    %v1587 = vpack.c.b16 %v1112, %v1093
    %v1588 = vpack.c.b16 %v1113, %v1094
    %v1589 = vpack.c.b16 %v1114, %v1095
    %v1590 = vpack.c.b16 %v1134, %v1115
    %v1591 = vpack.c.b16 %v1135, %v1116
    %v1592 = vpack.c.b16 %v1136, %v1117
    %v1593 = vpack.c.b16 %v1137, %v1118
    %v1594 = vpack.c.b16 %v1138, %v1119
    %v1595 = vpack.c.b16 %v1139, %v1120
    %v1596 = vpack.c.b16 %v1140, %v1121
    %v1597 = vpack.c.b16 %v1141, %v1122
    %v1598 = vpack.c.b16 %v1142, %v1123
    %v1599 = vpack.c.b16 %v1143, %v1124
    %v1600 = vpack.c.b16 %v1144, %v1125
    %v1601 = vpack.c.b16 %v1145, %v1126
    %v1602 = vpack.c.b16 %v1146, %v1127
    %v1603 = vpack.c.b16 %v1147, %v1128
    %v1604 = vpack.c.b16 %v1148, %v1129
    %v1605 = vpack.c.b16 %v1149, %v1130
    %v1606 = vpack.c.b16 %v1150, %v1131
    %v1607 = vpack.c.b16 %v1151, %v1132
    %v1608 = vpack.c.b16 %v1152, %v1133
    %v1609 = vpack.c.b16 %v1172, %v1153
    %v1610 = vpack.c.b16 %v1173, %v1154
    %v1611 = vpack.c.b16 %v1174, %v1155
    %v1612 = vpack.c.b16 %v1175, %v1156
    %v1613 = vpack.c.b16 %v1176, %v1157
    %v1614 = vpack.c.b16 %v1177, %v1158
    %v1615 = vpack.c.b16 %v1178, %v1159
    %v1616 = vpack.c.b16 %v1179, %v1160
    %v1617 = vpack.c.b16 %v1180, %v1161
    %v1618 = vpack.c.b16 %v1181, %v1162
    %v1619 = vpack.c.b16 %v1182, %v1163
    %v1620 = vpack.c.b16 %v1183, %v1164
    %v1621 = vpack.c.b16 %v1184, %v1165
    %v1622 = vpack.c.b16 %v1185, %v1166
    %v1623 = vpack.c.b16 %v1186, %v1167
    %v1624 = vpack.c.b16 %v1187, %v1168
    %v1625 = vpack.c.b16 %v1188, %v1169
    %v1626 = vpack.c.b16 %v1189, %v1170
    %v1627 = vpack.c.b16 %v1190, %v1171
    %v1628 = vpack.c.b16 %v1210, %v1191
    %v1629 = vpack.c.b16 %v1211, %v1192
    %v1630 = vpack.c.b16 %v1212, %v1193
    %v1631 = vpack.c.b16 %v1213, %v1194
    %v1632 = vpack.c.b16 %v1214, %v1195
    %v1633 = vpack.c.b16 %v1215, %v1196
    %v1634 = vpack.c.b16 %v1216, %v1197
    %v1635 = vpack.c.b16 %v1217, %v1198
    %v1636 = vpack.c.b16 %v1218, %v1199
    %v1637 = vpack.c.b16 %v1219, %v1200
    %v1638 = vpack.c.b16 %v1220, %v1201
    %v1639 = vpack.c.b16 %v1221, %v1202
    %v1640 = vpack.c.b16 %v1222, %v1203
    %v1641 = vpack.c.b16 %v1223, %v1204
    %v1642 = vpack.c.b16 %v1224, %v1205
    %v1643 = vpack.c.b16 %v1225, %v1206
    %v1644 = vpack.c.b16 %v1226, %v1207
    %v1645 = vpack.c.b16 %v1227, %v1208
    %v1646 = vpack.c.b16 %v1228, %v1209
    %v1647 = vpack.c.b16 %v1248, %v1229
    %v1648 = vpack.c.b16 %v1249, %v1230
    %v1649 = vpack.c.b16 %v1250, %v1231
    %v1650 = vpack.c.b16 %v1251, %v1232
    %v1651 = vpack.c.b16 %v1252, %v1233
    %v1652 = vpack.c.b16 %v1253, %v1234
    %v1653 = vpack.c.b16 %v1254, %v1235
    %v1654 = vpack.c.b16 %v1255, %v1236
    %v1655 = vpack.c.b16 %v1256, %v1237
    %v1656 = vpack.c.b16 %v1257, %v1238
    %v1657 = vpack.c.b16 %v1258, %v1239
    %v1658 = vpack.c.b16 %v1259, %v1240
    %v1659 = vpack.c.b16 %v1260, %v1241
    %v1660 = vpack.c.b16 %v1261, %v1242
    %v1661 = vpack.c.b16 %v1262, %v1243
    %v1662 = vpack.c.b16 %v1263, %v1244
    %v1663 = vpack.c.b16 %v1264, %v1245
    %v1664 = vpack.c.b16 %v1265, %v1246
    %v1665 = vpack.c.b16 %v1266, %v1247
    %v1666 = vpack.c.b16 %v1286, %v1267
    %v1667 = vpack.c.b16 %v1287, %v1268
    %v1668 = vpack.c.b16 %v1288, %v1269
    %v1669 = vpack.c.b16 %v1289, %v1270
    %v1670 = vpack.c.b16 %v1290, %v1271
    %v1671 = vpack.c.b16 %v1291, %v1272
    %v1672 = vpack.c.b16 %v1292, %v1273
    %v1673 = vpack.c.b16 %v1293, %v1274
    %v1674 = vpack.c.b16 %v1294, %v1275
    %v1675 = vpack.c.b16 %v1295, %v1276
    %v1676 = vpack.c.b16 %v1296, %v1277
    %v1677 = vpack.c.b16 %v1297, %v1278
    %v1678 = vpack.c.b16 %v1298, %v1279
    %v1679 = vpack.c.b16 %v1299, %v1280
    %v1680 = vpack.c.b16 %v1300, %v1281
    %v1681 = vpack.c.b16 %v1301, %v1282
    %v1682 = vpack.c.b16 %v1302, %v1283
    %v1683 = vpack.c.b16 %v1303, %v1284
    %v1684 = vpack.c.b16 %v1304, %v1285
    %v1685 = vpack.c.b16 %v1324, %v1305
    %v1686 = vpack.c.b16 %v1325, %v1306
    %v1687 = vpack.c.b16 %v1326, %v1307
    %v1688 = vpack.c.b16 %v1327, %v1308
    %v1689 = vpack.c.b16 %v1328, %v1309
    %v1690 = vpack.c.b16 %v1329, %v1310
    %v1691 = vpack.c.b16 %v1330, %v1311
    %v1692 = vpack.c.b16 %v1331, %v1312
    %v1693 = vpack.c.b16 %v1332, %v1313
    %v1694 = vpack.c.b16 %v1333, %v1314
    %v1695 = vpack.c.b16 %v1334, %v1315
    %v1696 = vpack.c.b16 %v1335, %v1316
    %v1697 = vpack.c.b16 %v1336, %v1317
    %v1698 = vpack.c.b16 %v1337, %v1318
    %v1699 = vpack.c.b16 %v1338, %v1319
    %v1700 = vpack.c.b16 %v1339, %v1320
    %v1701 = vpack.c.b16 %v1340, %v1321
    %v1702 = vpack.c.b16 %v1341, %v1322
    %v1703 = vpack.c.b16 %v1342, %v1323
    %v1704 = vpack.c.b16 %v1362, %v1343
    %v1705 = vpack.c.b16 %v1363, %v1344
    %v1706 = vpack.c.b16 %v1364, %v1345
    %v1707 = vpack.c.b16 %v1365, %v1346
    %v1708 = vpack.c.b16 %v1366, %v1347
    %v1709 = vpack.c.b16 %v1367, %v1348
    %v1710 = vpack.c.b16 %v1368, %v1349
    %v1711 = vpack.c.b16 %v1369, %v1350
    %v1712 = vpack.c.b16 %v1370, %v1351
    %v1713 = vpack.c.b16 %v1371, %v1352
    %v1714 = vpack.c.b16 %v1372, %v1353
    %v1715 = vpack.c.b16 %v1373, %v1354
    %v1716 = vpack.c.b16 %v1374, %v1355
    %v1717 = vpack.c.b16 %v1375, %v1356
    %v1718 = vpack.c.b16 %v1376, %v1357
    %v1719 = vpack.c.b16 %v1377, %v1358
    %v1720 = vpack.c.b16 %v1378, %v1359
    %v1721 = vpack.c.b16 %v1379, %v1360
    %v1722 = vpack.c.b16 %v1380, %v1361
    %v1723 = vpack.c.b16 %v1400, %v1381
    %v1724 = vpack.c.b16 %v1401, %v1382
    %v1725 = vpack.c.b16 %v1402, %v1383
    %v1726 = vpack.c.b16 %v1403, %v1384
    %v1727 = vpack.c.b16 %v1404, %v1385
    %v1728 = vpack.c.b16 %v1405, %v1386
    %v1729 = vpack.c.b16 %v1406, %v1387
    %v1730 = vpack.c.b16 %v1407, %v1388
    %v1731 = vpack.c.b16 %v1408, %v1389
    %v1732 = vpack.c.b16 %v1409, %v1390
    %v1733 = vpack.c.b16 %v1410, %v1391
    %v1734 = vpack.c.b16 %v1411, %v1392
    %v1735 = vpack.c.b16 %v1412, %v1393
    %v1736 = vpack.c.b16 %v1413, %v1394
    %v1737 = vpack.c.b16 %v1414, %v1395
    %v1738 = vpack.c.b16 %v1415, %v1396
    %v1739 = vpack.c.b16 %v1416, %v1397
    %v1740 = vpack.c.b16 %v1417, %v1398
    %v1741 = vpack.c.b16 %v1418, %v1399
    %v1742 = vpack.c.b16 %v1438, %v1419
    %v1743 = vpack.c.b16 %v1439, %v1420
    %v1744 = vpack.c.b16 %v1440, %v1421
    %v1745 = vpack.c.b16 %v1441, %v1422
    %v1746 = vpack.c.b16 %v1442, %v1423
    %v1747 = vpack.c.b16 %v1443, %v1424
    %v1748 = vpack.c.b16 %v1444, %v1425
    %v1749 = vpack.c.b16 %v1445, %v1426
    %v1750 = vpack.c.b16 %v1446, %v1427
    %v1751 = vpack.c.b16 %v1447, %v1428
    %v1752 = vpack.c.b16 %v1448, %v1429
    %v1753 = vpack.c.b16 %v1449, %v1430
    %v1754 = vpack.c.b16 %v1450, %v1431
    %v1755 = vpack.c.b16 %v1451, %v1432
    %v1756 = vpack.c.b16 %v1452, %v1433
    %v1757 = vpack.c.b16 %v1453, %v1434
    %v1758 = vpack.c.b16 %v1454, %v1435
    %v1759 = vpack.c.b16 %v1455, %v1436
    %v1760 = vpack.c.b16 %v1456, %v1437
    %2065 = vmatprep.subr.bf16.mxu0 %v1458
    %2066 = vmatpush1.bf16.msra.mxu0 %v1457
    %2067 = vmatprep.subr.bf16.mxu0 %v1477
    %2068 = vmatpush1.bf16.msra.mxu0 %v1476
    %2069 = vmatprep.subr.bf16.mxu0 %v1496
    %2070 = vmatpush1.bf16.msra.mxu0 %v1495
    %2071 = vmatprep.subr.bf16.mxu0 %v1515
    %2072 = vmatpush1.bf16.msra.mxu0 %v1514
    %2073 = vmatprep.subr.bf16.mxu0 %v1534
    %2074 = vmatpush1.bf16.msra.mxu0 %v1533
    %2075 = vmatprep.subr.bf16.mxu0 %v1553
    %2076 = vmatpush1.bf16.msra.mxu0 %v1552
    %2077 = vmatprep.subr.bf16.mxu0 %v1572
    %2078 = vmatpush1.bf16.msra.mxu0 %v1571
    %2079 = vmatprep.subr.bf16.mxu0 %v1591
    %2080 = vmatpush1.bf16.msra.mxu0 %v1590
    %2081 = vmatprep.subr.bf16.mxu0 %v1610
    %2082 = vmatpush1.bf16.msra.mxu0 %v1609
    %2083 = vmatprep.subr.bf16.mxu0 %v1629
    %2084 = vmatpush1.bf16.msra.mxu0 %v1628
    %2085 = vmatprep.subr.bf16.mxu0 %v1648
    %2086 = vmatpush1.bf16.msra.mxu0 %v1647
    %2087 = vmatprep.subr.bf16.mxu0 %v1667
    %2088 = vmatpush1.bf16.msra.mxu0 %v1666
    %2089 = vmatprep.subr.bf16.mxu0 %v1686
    %2090 = vmatpush1.bf16.msra.mxu0 %v1685
    %2091 = vmatprep.subr.bf16.mxu0 %v1705
    %2092 = vmatpush1.bf16.msra.mxu0 %v1704
    %2093 = vmatprep.subr.bf16.mxu0 %v1724
    %2094 = vmatpush1.bf16.msra.mxu0 %v1723
    %2095 = vmatprep.subr.bf16.mxu0 %v1743
    %2096 = vmatpush1.bf16.msra.mxu0 %v1742
    %2097 = vmatprep.mubr.bf16.mxu0 %v107
    %2098 = vmatmul.mubr.bf16.gmra.mrb[0].mxu0 %v106
    %v2099 = vpop.f32.mrb[0].mxu0
    %v2100 = vadd.f32 %v437, %v2099
    %v2101 = vpop.f32.mrb[0].mxu0
    %v2102 = vadd.f32 %v441, %v2101
    %v2103 = vpop.f32.mrb[0].mxu0
    %v2104 = vpop.f32.mrb[0].mxu0
    %2105 = vdwg.mxu0
    %2106 = vmatprep.subr.bf16.mxu0 %v1460
    %2107 = vmatpush1.bf16.msra.mxu0 %v1459
    %2108 = vmatprep.subr.bf16.mxu0 %v1479
    %2109 = vmatpush1.bf16.msra.mxu0 %v1478
    %2110 = vmatprep.subr.bf16.mxu0 %v1498
    %2111 = vmatpush1.bf16.msra.mxu0 %v1497
    %2112 = vmatprep.subr.bf16.mxu0 %v1517
    %2113 = vmatpush1.bf16.msra.mxu0 %v1516
    %2114 = vmatprep.subr.bf16.mxu0 %v1536
    %2115 = vmatpush1.bf16.msra.mxu0 %v1535
    %2116 = vmatprep.subr.bf16.mxu0 %v1555
    %2117 = vmatpush1.bf16.msra.mxu0 %v1554
    %2118 = vmatprep.subr.bf16.mxu0 %v1574
    %2119 = vmatpush1.bf16.msra.mxu0 %v1573
    %2120 = vmatprep.subr.bf16.mxu0 %v1593
    %2121 = vmatpush1.bf16.msra.mxu0 %v1592
    %2122 = vmatprep.subr.bf16.mxu0 %v1612
    %2123 = vmatpush1.bf16.msra.mxu0 %v1611
    %2124 = vmatprep.subr.bf16.mxu0 %v1631
    %2125 = vmatpush1.bf16.msra.mxu0 %v1630
    %2126 = vmatprep.subr.bf16.mxu0 %v1650
    %2127 = vmatpush1.bf16.msra.mxu0 %v1649
    %2128 = vmatprep.subr.bf16.mxu0 %v1669
    %2129 = vmatpush1.bf16.msra.mxu0 %v1668
    %2130 = vmatprep.subr.bf16.mxu0 %v1688
    %2131 = vmatpush1.bf16.msra.mxu0 %v1687
    %2132 = vmatprep.subr.bf16.mxu0 %v1707
    %2133 = vmatpush1.bf16.msra.mxu0 %v1706
    %2134 = vmatprep.subr.bf16.mxu0 %v1726
    %2135 = vmatpush1.bf16.msra.mxu0 %v1725
    %2136 = vmatprep.subr.bf16.mxu0 %v1745
    %2137 = vmatpush1.bf16.msra.mxu0 %v1744
    %2138 = vmatprep.mubr.bf16.mxu0 %v107
    %2139 = vmatmul.mubr.bf16.gmra.mrb[0].mxu0 %v106
    %v2140 = vpop.f32.mrb[0].mxu0
    %v2141 = vadd.f32 %v445, %v2140
    %v2142 = vpop.f32.mrb[0].mxu0
    %v2143 = vadd.f32 %v449, %v2142
    %v2144 = vpop.f32.mrb[0].mxu0
    %v2145 = vpop.f32.mrb[0].mxu0
    %2146 = vdwg.mxu0
    %2147 = vmatprep.subr.bf16.mxu0 %v1462
    %2148 = vmatpush1.bf16.msra.mxu0 %v1461
    %2149 = vmatprep.subr.bf16.mxu0 %v1481
    %2150 = vmatpush1.bf16.msra.mxu0 %v1480
    %2151 = vmatprep.subr.bf16.mxu0 %v1500
    %2152 = vmatpush1.bf16.msra.mxu0 %v1499
    %2153 = vmatprep.subr.bf16.mxu0 %v1519
    %2154 = vmatpush1.bf16.msra.mxu0 %v1518
    %2155 = vmatprep.subr.bf16.mxu0 %v1538
    %2156 = vmatpush1.bf16.msra.mxu0 %v1537
    %2157 = vmatprep.subr.bf16.mxu0 %v1557
    %2158 = vmatpush1.bf16.msra.mxu0 %v1556
    %2159 = vmatprep.subr.bf16.mxu0 %v1576
    %2160 = vmatpush1.bf16.msra.mxu0 %v1575
    %2161 = vmatprep.subr.bf16.mxu0 %v1595
    %2162 = vmatpush1.bf16.msra.mxu0 %v1594
    %2163 = vmatprep.subr.bf16.mxu0 %v1614
    %2164 = vmatpush1.bf16.msra.mxu0 %v1613
    %2165 = vmatprep.subr.bf16.mxu0 %v1633
    %2166 = vmatpush1.bf16.msra.mxu0 %v1632
    %2167 = vmatprep.subr.bf16.mxu0 %v1652
    %2168 = vmatpush1.bf16.msra.mxu0 %v1651
    %2169 = vmatprep.subr.bf16.mxu0 %v1671
    %2170 = vmatpush1.bf16.msra.mxu0 %v1670
    %2171 = vmatprep.subr.bf16.mxu0 %v1690
    %2172 = vmatpush1.bf16.msra.mxu0 %v1689
    %2173 = vmatprep.subr.bf16.mxu0 %v1709
    %2174 = vmatpush1.bf16.msra.mxu0 %v1708
    %2175 = vmatprep.subr.bf16.mxu0 %v1728
    %2176 = vmatpush1.bf16.msra.mxu0 %v1727
    %2177 = vmatprep.subr.bf16.mxu0 %v1747
    %2178 = vmatpush1.bf16.msra.mxu0 %v1746
    %2179 = vmatprep.mubr.bf16.mxu0 %v107
    %2180 = vmatmul.mubr.bf16.gmra.mrb[0].mxu0 %v106
    %v2181 = vpop.f32.mrb[0].mxu0
    %v2182 = vadd.f32 %v453, %v2181
    %v2183 = vpop.f32.mrb[0].mxu0
    %v2184 = vadd.f32 %v457, %v2183
    %v2185 = vpop.f32.mrb[0].mxu0
    %v2186 = vpop.f32.mrb[0].mxu0
    %2187 = vdwg.mxu0
    %2188 = vmatprep.subr.bf16.mxu0 %v1464
    %2189 = vmatpush1.bf16.msra.mxu0 %v1463
    %2190 = vmatprep.subr.bf16.mxu0 %v1483
    %2191 = vmatpush1.bf16.msra.mxu0 %v1482
    %2192 = vmatprep.subr.bf16.mxu0 %v1502
    %2193 = vmatpush1.bf16.msra.mxu0 %v1501
    %2194 = vmatprep.subr.bf16.mxu0 %v1521
    %2195 = vmatpush1.bf16.msra.mxu0 %v1520
    %2196 = vmatprep.subr.bf16.mxu0 %v1540
    %2197 = vmatpush1.bf16.msra.mxu0 %v1539
    %2198 = vmatprep.subr.bf16.mxu0 %v1559
    %2199 = vmatpush1.bf16.msra.mxu0 %v1558
    %2200 = vmatprep.subr.bf16.mxu0 %v1578
    %2201 = vmatpush1.bf16.msra.mxu0 %v1577
    %2202 = vmatprep.subr.bf16.mxu0 %v1597
    %2203 = vmatpush1.bf16.msra.mxu0 %v1596
    %2204 = vmatprep.subr.bf16.mxu0 %v1616
    %2205 = vmatpush1.bf16.msra.mxu0 %v1615
    %2206 = vmatprep.subr.bf16.mxu0 %v1635
    %2207 = vmatpush1.bf16.msra.mxu0 %v1634
    %2208 = vmatprep.subr.bf16.mxu0 %v1654
    %2209 = vmatpush1.bf16.msra.mxu0 %v1653
    %2210 = vmatprep.subr.bf16.mxu0 %v1673
    %2211 = vmatpush1.bf16.msra.mxu0 %v1672
    %2212 = vmatprep.subr.bf16.mxu0 %v1692
    %2213 = vmatpush1.bf16.msra.mxu0 %v1691
    %2214 = vmatprep.subr.bf16.mxu0 %v1711
    %2215 = vmatpush1.bf16.msra.mxu0 %v1710
    %2216 = vmatprep.subr.bf16.mxu0 %v1730
    %2217 = vmatpush1.bf16.msra.mxu0 %v1729
    %2218 = vmatprep.subr.bf16.mxu0 %v1749
    %2219 = vmatpush1.bf16.msra.mxu0 %v1748
    %2220 = vmatprep.mubr.bf16.mxu0 %v107
    %2221 = vmatmul.mubr.bf16.gmra.mrb[0].mxu0 %v106
    %v2222 = vpop.f32.mrb[0].mxu0
    %v2223 = vadd.f32 %v461, %v2222
    %v2224 = vpop.f32.mrb[0].mxu0
    %v2225 = vadd.f32 %v465, %v2224
    %v2226 = vpop.f32.mrb[0].mxu0
    %v2227 = vpop.f32.mrb[0].mxu0
    %2228 = vdwg.mxu0
    %2229 = vmatprep.subr.bf16.mxu0 %v1466
    %2230 = vmatpush1.bf16.msra.mxu0 %v1465
    %2231 = vmatprep.subr.bf16.mxu0 %v1485
    %2232 = vmatpush1.bf16.msra.mxu0 %v1484
    %2233 = vmatprep.subr.bf16.mxu0 %v1504
    %2234 = vmatpush1.bf16.msra.mxu0 %v1503
    %2235 = vmatprep.subr.bf16.mxu0 %v1523
    %2236 = vmatpush1.bf16.msra.mxu0 %v1522
    %2237 = vmatprep.subr.bf16.mxu0 %v1542
    %2238 = vmatpush1.bf16.msra.mxu0 %v1541
    %2239 = vmatprep.subr.bf16.mxu0 %v1561
    %2240 = vmatpush1.bf16.msra.mxu0 %v1560
    %2241 = vmatprep.subr.bf16.mxu0 %v1580
    %2242 = vmatpush1.bf16.msra.mxu0 %v1579
    %2243 = vmatprep.subr.bf16.mxu0 %v1599
    %2244 = vmatpush1.bf16.msra.mxu0 %v1598
    %2245 = vmatprep.subr.bf16.mxu0 %v1618
    %2246 = vmatpush1.bf16.msra.mxu0 %v1617
    %2247 = vmatprep.subr.bf16.mxu0 %v1637
    %2248 = vmatpush1.bf16.msra.mxu0 %v1636
    %2249 = vmatprep.subr.bf16.mxu0 %v1656
    %2250 = vmatpush1.bf16.msra.mxu0 %v1655
    %2251 = vmatprep.subr.bf16.mxu0 %v1675
    %2252 = vmatpush1.bf16.msra.mxu0 %v1674
    %2253 = vmatprep.subr.bf16.mxu0 %v1694
    %2254 = vmatpush1.bf16.msra.mxu0 %v1693
    %2255 = vmatprep.subr.bf16.mxu0 %v1713
    %2256 = vmatpush1.bf16.msra.mxu0 %v1712
    %2257 = vmatprep.subr.bf16.mxu0 %v1732
    %2258 = vmatpush1.bf16.msra.mxu0 %v1731
    %2259 = vmatprep.subr.bf16.mxu0 %v1751
    %2260 = vmatpush1.bf16.msra.mxu0 %v1750
    %2261 = vmatprep.mubr.bf16.mxu0 %v107
    %2262 = vmatmul.mubr.bf16.gmra.mrb[0].mxu0 %v106
    %v2263 = vpop.f32.mrb[0].mxu0
    %v2264 = vadd.f32 %v469, %v2263
    %v2265 = vpop.f32.mrb[0].mxu0
    %v2266 = vadd.f32 %v473, %v2265
    %v2267 = vpop.f32.mrb[0].mxu0
    %v2268 = vpop.f32.mrb[0].mxu0
    %2269 = vdwg.mxu0
    %2270 = vmatprep.subr.bf16.mxu0 %v1468
    %2271 = vmatpush1.bf16.msra.mxu0 %v1467
    %2272 = vmatprep.subr.bf16.mxu0 %v1487
    %2273 = vmatpush1.bf16.msra.mxu0 %v1486
    %2274 = vmatprep.subr.bf16.mxu0 %v1506
    %2275 = vmatpush1.bf16.msra.mxu0 %v1505
    %2276 = vmatprep.subr.bf16.mxu0 %v1525
    %2277 = vmatpush1.bf16.msra.mxu0 %v1524
    %2278 = vmatprep.subr.bf16.mxu0 %v1544
    %2279 = vmatpush1.bf16.msra.mxu0 %v1543
    %2280 = vmatprep.subr.bf16.mxu0 %v1563
    %2281 = vmatpush1.bf16.msra.mxu0 %v1562
    %2282 = vmatprep.subr.bf16.mxu0 %v1582
    %2283 = vmatpush1.bf16.msra.mxu0 %v1581
    %2284 = vmatprep.subr.bf16.mxu0 %v1601
    %2285 = vmatpush1.bf16.msra.mxu0 %v1600
    %2286 = vmatprep.subr.bf16.mxu0 %v1620
    %2287 = vmatpush1.bf16.msra.mxu0 %v1619
    %2288 = vmatprep.subr.bf16.mxu0 %v1639
    %2289 = vmatpush1.bf16.msra.mxu0 %v1638
    %2290 = vmatprep.subr.bf16.mxu0 %v1658
    %2291 = vmatpush1.bf16.msra.mxu0 %v1657
    %2292 = vmatprep.subr.bf16.mxu0 %v1677
    %2293 = vmatpush1.bf16.msra.mxu0 %v1676
    %2294 = vmatprep.subr.bf16.mxu0 %v1696
    %2295 = vmatpush1.bf16.msra.mxu0 %v1695
    %2296 = vmatprep.subr.bf16.mxu0 %v1715
    %2297 = vmatpush1.bf16.msra.mxu0 %v1714
    %2298 = vmatprep.subr.bf16.mxu0 %v1734
    %2299 = vmatpush1.bf16.msra.mxu0 %v1733
    %2300 = vmatprep.subr.bf16.mxu0 %v1753
    %2301 = vmatpush1.bf16.msra.mxu0 %v1752
    %2302 = vmatprep.mubr.bf16.mxu0 %v107
    %2303 = vmatmul.mubr.bf16.gmra.mrb[0].mxu0 %v106
    %v2304 = vpop.f32.mrb[0].mxu0
    %v2305 = vadd.f32 %v477, %v2304
    %v2306 = vpop.f32.mrb[0].mxu0
    %v2307 = vadd.f32 %v481, %v2306
    %v2308 = vpop.f32.mrb[0].mxu0
    %v2309 = vpop.f32.mrb[0].mxu0
    %2310 = vdwg.mxu0
    %2311 = vmatprep.subr.bf16.mxu0 %v1470
    %2312 = vmatpush1.bf16.msra.mxu0 %v1469
    %2313 = vmatprep.subr.bf16.mxu0 %v1489
    %2314 = vmatpush1.bf16.msra.mxu0 %v1488
    %2315 = vmatprep.subr.bf16.mxu0 %v1508
    %2316 = vmatpush1.bf16.msra.mxu0 %v1507
    %2317 = vmatprep.subr.bf16.mxu0 %v1527
    %2318 = vmatpush1.bf16.msra.mxu0 %v1526
    %2319 = vmatprep.subr.bf16.mxu0 %v1546
    %2320 = vmatpush1.bf16.msra.mxu0 %v1545
    %2321 = vmatprep.subr.bf16.mxu0 %v1565
    %2322 = vmatpush1.bf16.msra.mxu0 %v1564
    %2323 = vmatprep.subr.bf16.mxu0 %v1584
    %2324 = vmatpush1.bf16.msra.mxu0 %v1583
    %2325 = vmatprep.subr.bf16.mxu0 %v1603
    %2326 = vmatpush1.bf16.msra.mxu0 %v1602
    %2327 = vmatprep.subr.bf16.mxu0 %v1622
    %2328 = vmatpush1.bf16.msra.mxu0 %v1621
    %2329 = vmatprep.subr.bf16.mxu0 %v1641
    %2330 = vmatpush1.bf16.msra.mxu0 %v1640
    %2331 = vmatprep.subr.bf16.mxu0 %v1660
    %2332 = vmatpush1.bf16.msra.mxu0 %v1659
    %2333 = vmatprep.subr.bf16.mxu0 %v1679
    %2334 = vmatpush1.bf16.msra.mxu0 %v1678
    %2335 = vmatprep.subr.bf16.mxu0 %v1698
    %2336 = vmatpush1.bf16.msra.mxu0 %v1697
    %2337 = vmatprep.subr.bf16.mxu0 %v1717
    %2338 = vmatpush1.bf16.msra.mxu0 %v1716
    %2339 = vmatprep.subr.bf16.mxu0 %v1736
    %2340 = vmatpush1.bf16.msra.mxu0 %v1735
    %2341 = vmatprep.subr.bf16.mxu0 %v1755
    %2342 = vmatpush1.bf16.msra.mxu0 %v1754
    %2343 = vmatprep.mubr.bf16.mxu0 %v107
    %2344 = vmatmul.mubr.bf16.gmra.mrb[0].mxu0 %v106
    %v2345 = vpop.f32.mrb[0].mxu0
    %v2346 = vadd.f32 %v485, %v2345
    %v2347 = vpop.f32.mrb[0].mxu0
    %v2348 = vadd.f32 %v489, %v2347
    %v2349 = vpop.f32.mrb[0].mxu0
    %v2350 = vpop.f32.mrb[0].mxu0
    %2351 = vdwg.mxu0
    %2352 = vmatprep.subr.bf16.mxu0 %v1472
    %2353 = vmatpush1.bf16.msra.mxu0 %v1471
    %2354 = vmatprep.subr.bf16.mxu0 %v1491
    %2355 = vmatpush1.bf16.msra.mxu0 %v1490
    %2356 = vmatprep.subr.bf16.mxu0 %v1510
    %2357 = vmatpush1.bf16.msra.mxu0 %v1509
    %2358 = vmatprep.subr.bf16.mxu0 %v1529
    %2359 = vmatpush1.bf16.msra.mxu0 %v1528
    %2360 = vmatprep.subr.bf16.mxu0 %v1548
    %2361 = vmatpush1.bf16.msra.mxu0 %v1547
    %2362 = vmatprep.subr.bf16.mxu0 %v1567
    %2363 = vmatpush1.bf16.msra.mxu0 %v1566
    %2364 = vmatprep.subr.bf16.mxu0 %v1586
    %2365 = vmatpush1.bf16.msra.mxu0 %v1585
    %2366 = vmatprep.subr.bf16.mxu0 %v1605
    %2367 = vmatpush1.bf16.msra.mxu0 %v1604
    %2368 = vmatprep.subr.bf16.mxu0 %v1624
    %2369 = vmatpush1.bf16.msra.mxu0 %v1623
    %2370 = vmatprep.subr.bf16.mxu0 %v1643
    %2371 = vmatpush1.bf16.msra.mxu0 %v1642
    %2372 = vmatprep.subr.bf16.mxu0 %v1662
    %2373 = vmatpush1.bf16.msra.mxu0 %v1661
    %2374 = vmatprep.subr.bf16.mxu0 %v1681
    %2375 = vmatpush1.bf16.msra.mxu0 %v1680
    %2376 = vmatprep.subr.bf16.mxu0 %v1700
    %2377 = vmatpush1.bf16.msra.mxu0 %v1699
    %2378 = vmatprep.subr.bf16.mxu0 %v1719
    %2379 = vmatpush1.bf16.msra.mxu0 %v1718
    %2380 = vmatprep.subr.bf16.mxu0 %v1738
    %2381 = vmatpush1.bf16.msra.mxu0 %v1737
    %2382 = vmatprep.subr.bf16.mxu0 %v1757
    %2383 = vmatpush1.bf16.msra.mxu0 %v1756
    %2384 = vmatprep.mubr.bf16.mxu0 %v107
    %2385 = vmatmul.mubr.bf16.gmra.mrb[0].mxu0 %v106
    %v2386 = vpop.f32.mrb[0].mxu0
    %v2387 = vadd.f32 %v493, %v2386
    %v2388 = vpop.f32.mrb[0].mxu0
    %v2389 = vadd.f32 %v497, %v2388
    %v2390 = vpop.f32.mrb[0].mxu0
    %v2391 = vpop.f32.mrb[0].mxu0
    %2392 = vdwg.mxu0
    %2393 = vmatprep.subr.bf16.mxu0 %v1474
    %2394 = vmatpush1.bf16.msra.mxu0 %v1473
    %2395 = vmatprep.subr.bf16.mxu0 %v1493
    %2396 = vmatpush1.bf16.msra.mxu0 %v1492
    %2397 = vmatprep.subr.bf16.mxu0 %v1512
    %2398 = vmatpush1.bf16.msra.mxu0 %v1511
    %2399 = vmatprep.subr.bf16.mxu0 %v1531
    %2400 = vmatpush1.bf16.msra.mxu0 %v1530
    %2401 = vmatprep.subr.bf16.mxu0 %v1550
    %2402 = vmatpush1.bf16.msra.mxu0 %v1549
    %2403 = vmatprep.subr.bf16.mxu0 %v1569
    %2404 = vmatpush1.bf16.msra.mxu0 %v1568
    %2405 = vmatprep.subr.bf16.mxu0 %v1588
    %2406 = vmatpush1.bf16.msra.mxu0 %v1587
    %2407 = vmatprep.subr.bf16.mxu0 %v1607
    %2408 = vmatpush1.bf16.msra.mxu0 %v1606
    %2409 = vmatprep.subr.bf16.mxu0 %v1626
    %2410 = vmatpush1.bf16.msra.mxu0 %v1625
    %2411 = vmatprep.subr.bf16.mxu0 %v1645
    %2412 = vmatpush1.bf16.msra.mxu0 %v1644
    %2413 = vmatprep.subr.bf16.mxu0 %v1664
    %2414 = vmatpush1.bf16.msra.mxu0 %v1663
    %2415 = vmatprep.subr.bf16.mxu0 %v1683
    %2416 = vmatpush1.bf16.msra.mxu0 %v1682
    %2417 = vmatprep.subr.bf16.mxu0 %v1702
    %2418 = vmatpush1.bf16.msra.mxu0 %v1701
    %2419 = vmatprep.subr.bf16.mxu0 %v1721
    %2420 = vmatpush1.bf16.msra.mxu0 %v1720
    %2421 = vmatprep.subr.bf16.mxu0 %v1740
    %2422 = vmatpush1.bf16.msra.mxu0 %v1739
    %2423 = vmatprep.subr.bf16.mxu0 %v1759
    %2424 = vmatpush1.bf16.msra.mxu0 %v1758
    %2425 = vmatprep.mubr.bf16.mxu0 %v107
    %2426 = vmatmul.mubr.bf16.gmra.mrb[0].mxu0 %v106
    %v2427 = vpop.f32.mrb[0].mxu0
    %v2428 = vadd.f32 %v501, %v2427
    %v2429 = vpop.f32.mrb[0].mxu0
    %v2430 = vadd.f32 %v505, %v2429
    %v2431 = vpop.f32.mrb[0].mxu0
    %v2432 = vpop.f32.mrb[0].mxu0
    %2433 = vdwg.mxu0
    %2434 = vmatprep.subr.bf16.mxu0 0
    %2435 = vmatpush1.bf16.msra.mxu0 %v1475
    %2436 = vmatprep.subr.bf16.mxu0 0
    %2437 = vmatpush1.bf16.msra.mxu0 %v1494
    %2438 = vmatprep.subr.bf16.mxu0 0
    %2439 = vmatpush1.bf16.msra.mxu0 %v1513
    %2440 = vmatprep.subr.bf16.mxu0 0
    %2441 = vmatpush1.bf16.msra.mxu0 %v1532
    %2442 = vmatprep.subr.bf16.mxu0 0
    %2443 = vmatpush1.bf16.msra.mxu0 %v1551
    %2444 = vmatprep.subr.bf16.mxu0 0
    %2445 = vmatpush1.bf16.msra.mxu0 %v1570
    %2446 = vmatprep.subr.bf16.mxu0 0
    %2447 = vmatpush1.bf16.msra.mxu0 %v1589
    %2448 = vmatprep.subr.bf16.mxu0 0
    %2449 = vmatpush1.bf16.msra.mxu0 %v1608
    %2450 = vmatprep.subr.bf16.mxu0 0
    %2451 = vmatpush1.bf16.msra.mxu0 %v1627
    %2452 = vmatprep.subr.bf16.mxu0 0
    %2453 = vmatpush1.bf16.msra.mxu0 %v1646
    %2454 = vmatprep.subr.bf16.mxu0 0
    %2455 = vmatpush1.bf16.msra.mxu0 %v1665
    %2456 = vmatprep.subr.bf16.mxu0 0
    %2457 = vmatpush1.bf16.msra.mxu0 %v1684
    %2458 = vmatprep.subr.bf16.mxu0 0
    %2459 = vmatpush1.bf16.msra.mxu0 %v1703
    %2460 = vmatprep.subr.bf16.mxu0 0
    %2461 = vmatpush1.bf16.msra.mxu0 %v1722
    %2462 = vmatprep.subr.bf16.mxu0 0
    %2463 = vmatpush1.bf16.msra.mxu0 %v1741
    %2464 = vmatprep.subr.bf16.mxu0 0
    %2465 = vmatpush1.bf16.msra.mxu0 %v1760
    %2466 = vmatprep.mubr.bf16.mxu0 %v107
    %2467 = vmatmul.mubr.bf16.gmra.mrb[0].mxu0 %v106
    %v2468 = vpop.f32.mrb[0].mxu0
    %v2469 = vadd.f32 %v509, %v2468
    %v2470 = vpop.f32.mrb[0].mxu0
    %v2471 = vpop.f32.mrb[0].mxu0
    %v2472 = vpop.f32.mrb[0].mxu0
    %2473 = vdwg.mxu0
    %v2474 = vtanh.pop %v2100
    %v2475 = vtanh.pop %v2102
    %v2476 = vtanh.pop %v2141
    %v2477 = vtanh.pop %v2143
    %v2478 = vtanh.pop %v2182
    %v2479 = vtanh.pop %v2184
    %v2480 = vtanh.pop %v2223
    %v2481 = vtanh.pop %v2225
    %v2482 = vtanh.pop %v2264
    %v2483 = vtanh.pop %v2266
    %v2484 = vtanh.pop %v2305
    %v2485 = vtanh.pop %v2307
    %v2486 = vtanh.pop %v2346
    %v2487 = vtanh.pop %v2348
    %v2488 = vtanh.pop %v2387
    %v2489 = vtanh.pop %v2389
    %v2490 = vtanh.pop %v2428
    %v2491 = vtanh.pop %v2430
    %v2492 = vtanh.pop %v2469
    %v2493 = vpack.c.bf16 %v2474, %v2474
    %v2494 = vpack.c.bf16 %v2475, %v2475
    %v2495 = vpack.c.bf16 %v2476, %v2476
    %v2496 = vpack.c.bf16 %v2477, %v2477
    %v2497 = vpack.c.bf16 %v2478, %v2478
    %v2498 = vpack.c.bf16 %v2479, %v2479
    %v2499 = vpack.c.bf16 %v2480, %v2480
    %v2500 = vpack.c.bf16 %v2481, %v2481
    %v2501 = vpack.c.bf16 %v2482, %v2482
    %v2502 = vpack.c.bf16 %v2483, %v2483
    %v2503 = vpack.c.bf16 %v2484, %v2484
    %v2504 = vpack.c.bf16 %v2485, %v2485
    %v2505 = vpack.c.bf16 %v2486, %v2486
    %v2506 = vpack.c.bf16 %v2487, %v2487
    %v2507 = vpack.c.bf16 %v2488, %v2488
    %v2508 = vpack.c.bf16 %v2489, %v2489
    %v2509 = vpack.c.bf16 %v2490, %v2490
    %v2510 = vpack.c.bf16 %v2491, %v2491
    %v2511 = vpack.c.bf16 %v2492, %v2492
    %v2531 = vunpack.c.l.b16 %v2493
    %v2532 = vunpack.c.l.b16 %v2494
    %v2533 = vunpack.c.l.b16 %v2495
    %v2534 = vunpack.c.l.b16 %v2496
    %v2535 = vunpack.c.l.b16 %v2497
    %v2536 = vunpack.c.l.b16 %v2498
    %v2537 = vunpack.c.l.b16 %v2499
    %v2538 = vunpack.c.l.b16 %v2500
    %v2539 = vunpack.c.l.b16 %v2501
    %v2540 = vunpack.c.l.b16 %v2502
    %v2541 = vunpack.c.l.b16 %v2503
    %v2542 = vunpack.c.l.b16 %v2504
    %v2543 = vunpack.c.l.b16 %v2505
    %v2544 = vunpack.c.l.b16 %v2506
    %v2545 = vunpack.c.l.b16 %v2507
    %v2546 = vunpack.c.l.b16 %v2508
    %v2547 = vunpack.c.l.b16 %v2509
    %v2548 = vunpack.c.l.b16 %v2510
    %v2549 = vunpack.c.l.b16 %v2511
    %v2550 = vpack.c.b16 %v2532, %v2531
    %v2551 = vpack.c.b16 %v2534, %v2533
    %v2552 = vpack.c.b16 %v2536, %v2535
    %v2553 = vpack.c.b16 %v2538, %v2537
    %v2554 = vpack.c.b16 %v2540, %v2539
    %v2555 = vpack.c.b16 %v2542, %v2541
    %v2556 = vpack.c.b16 %v2544, %v2543
    %v2557 = vpack.c.b16 %v2546, %v2545
    %v2558 = vpack.c.b16 %v2548, %v2547
    %v2559 = vpack.c.b16 %v2549, %v2549
    %2570 = vst [vmem:[#allocation2] sm:$0xff] %v2550
    %2571 = vst [vmem:[#allocation2 + $0x8] sm:$0xff] %v2551
    %2572 = vst [vmem:[#allocation2 + $0x10] sm:$0xff] %v2552
    %2573 = vst [vmem:[#allocation2 + $0x18] sm:$0xff] %v2553
    %2574 = vst [vmem:[#allocation2 + $0x20] sm:$0xff] %v2554
    %2575 = vst [vmem:[#allocation2 + $0x28] sm:$0xff] %v2555
    %2576 = vst [vmem:[#allocation2 + $0x30] sm:$0xff] %v2556
    %2577 = vst [vmem:[#allocation2 + $0x38] sm:$0xff] %v2557
    %2578 = vst [vmem:[#allocation2 + $0x40] sm:$0xff] %v2558
    %vm2579 = vcmask 388096
    %2580 = vst.msk [vmem:[#allocation2 + $0x48] sm:$0xf] %vm2579, %v2559
    // Predicated region
    $region22: #{tpu_custom_call.1} parent=1 // pred_check
      _
    $region23: #{tpu_custom_call.1} parent=1 // pred_check_branch
      %2582 = sbr.rel (0) target = $region25
    $region24: #{tpu_custom_call.1} parent=1 // pred_region
      %s2584 = ssub.s32 1216, 1216
      %2585 = vsyncadd [#allocation3], %s2584
      %s2587 = sshll.u32 [#allocation2], 4
      %s2588 = int_to_ptr.vmem [resolvable:$true] %s2587
      %2590 = dma.vmem_to_hbm [thread:$0]  %s2588, 1216, %s5, [#allocation3]
    $region25: #{tpu_custom_call.1} parent=1 // pred_fallthru
      _
    // Predicated region
    $region26: #{tpu_custom_call.1} parent=1 // pred_check
      _
    $region27: #{tpu_custom_call.1} parent=1 // pred_check_branch
      %2592 = sbr.rel (0) target = $region29
    $region28: #{tpu_custom_call.1} parent=1 // pred_region
      %2593 = dma.done [#allocation3], 1216
    $region29: #{tpu_custom_call.1} parent=1 // pred_fallthru
      _
    %2594 = vsyncpa [#allocation3], 1

</llo_original>
